<compile_context>
chip_gen: v7x
topology: tpu7x:2x2x1
jax: 0.10.0
libtpu: 0.0.40
codegen_flags: <defaults>
</compile_context>

<pallas_src>
import functools

import jax
import jax.numpy as jnp
from jax import lax
from jax.experimental import pallas as pl
from jax.experimental.pallas import tpu as pltpu


def _mha_kernel(q_ref, k_ref, v_ref, wq_ref, wk_ref, wv_ref, wfc_ref, out_ref,
                *, n_head, n_hidden):
    """One batch element per grid step; all heads fused inside the body."""
    q = q_ref[0]            # [L, D]
    k = k_ref[0]            # [L, D]
    v = v_ref[0]            # [L, D]
    wq = wq_ref[...]        # [D, n_head*H]   (head-fused, pre-transposed)
    wk = wk_ref[...]        # [D, n_head*H]
    wv = wv_ref[...]        # [D, n_head*H]
    wfc = wfc_ref[...]      # [n_head*H, D]   (pre-transposed)

    # Fused per-head projections: one MXU matmul each instead of n_head tiny ones.
    qp = jnp.dot(q, wq, preferred_element_type=jnp.float32)   # [L, n_head*H]
    kp = jnp.dot(k, wk, preferred_element_type=jnp.float32)   # [L, n_head*H]
    vp = jnp.dot(v, wv, preferred_element_type=jnp.float32)   # [L, n_head*H]

    scale = 1.0 / (n_hidden ** 0.5)
    ctx = []
    # n_head is a compile-time constant -> static unroll with static lane slices.
    for h in range(n_head):
        sl = slice(h * n_hidden, (h + 1) * n_hidden)
        qh = qp[:, sl]      # [L, H]
        kh = kp[:, sl]      # [L, H]
        vh = vp[:, sl]      # [L, H]
        # scores = qh @ kh^T expressed via dot_general (no explicit in-kernel transpose)
        s = lax.dot_general(qh, kh, (((1,), (1,)), ((), ())),
                            preferred_element_type=jnp.float32) * scale   # [L, L]
        # TODO(synk): optional additive `mask` argument not plumbed (forward default is None)
        s_max = jnp.max(s, axis=-1, keepdims=True)
        p = jnp.exp(s - s_max)
        # approx reciprocal -> EUP slot (otherwise idle here), frees VALU cycles
        p = p * pl.reciprocal(jnp.sum(p, axis=-1, keepdims=True), approx=True)
        ctx.append(jnp.dot(p, vh, preferred_element_type=jnp.float32))    # [L, H]

    # concat over heads + final FC as one matmul; write output directly (no scratch).
    x = jnp.concatenate(ctx, axis=-1)                                     # [L, n_head*H]
    out_ref[0] = jnp.dot(x, wfc, preferred_element_type=jnp.float32).astype(out_ref.dtype)
    # TODO(synk): for long sequences (esp. v7x with 64 MiB VMEM) replace the full
    # [L, L] score tile with a KV-tiled online-softmax (flash-style) inner loop.


def mha_pallas(q, k, v, wq, wk, wv, wfc):
    """q,k,v: [B, L, D]; wq/wk/wv: [n_head, H, D]; wfc: [D, n_head*H]."""
    B, L, D = q.shape
    n_head, H, _ = wq.shape

    # Wrapper-side (free, XLA) weight fusion + transpose:
    #   per-head projection x @ wq[h].T  ==  x @ W  with  W = concat_h wq[h].T  -> [D, n_head*H]
    wq_all = wq.transpose(2, 0, 1).reshape(D, n_head * H)
    wk_all = wk.transpose(2, 0, 1).reshape(D, n_head * H)
    wv_all = wv.transpose(2, 0, 1).reshape(D, n_head * H)
    wfc_t = wfc.T                                             # [n_head*H, D]

    qkv_spec = pl.BlockSpec((1, L, D), lambda b: (b, 0, 0))
    wproj_spec = pl.BlockSpec((D, n_head * H), lambda b: (0, 0))
    wfc_spec = pl.BlockSpec((n_head * H, D), lambda b: (0, 0))
    out_spec = pl.BlockSpec((1, L, D), lambda b: (b, 0, 0))

    kernel = functools.partial(_mha_kernel, n_head=n_head, n_hidden=H)

    return pl.pallas_call(
        kernel,
        out_shape=jax.ShapeDtypeStruct((B, L, D), q.dtype),
        grid=(B,),
        in_specs=[qkv_spec, qkv_spec, qkv_spec,
                  wproj_spec, wproj_spec, wproj_spec, wfc_spec],
        out_specs=out_spec,
        # batch axis 'parallel' (extent >= 2) so v7x's two TensorCores both get work;
        # no reduction grid axis remains (heads are fused inside the body).
        compiler_params=pltpu.CompilerParams(dimension_semantics=("parallel",)),
    )(q, k, v, wq_all, wk_all, wv_all, wfc_t)


def mha_reference(q, k, v, wq, wk, wv, wfc):
    """Pure-JAX reference mirroring the PyTorch module."""
    n_head, H, _ = wq.shape
    outs = []
    for h in range(n_head):
        qh = q @ wq[h].T
        kh = k @ wk[h].T
        vh = v @ wv[h].T
        s = jnp.einsum('bld,bjd->blj', qh, kh) / (H ** 0.5)
        p = jax.nn.softmax(s, axis=-1)
        outs.append(jnp.einsum('blj,bjd->bld', p, vh))
    x = jnp.concatenate(outs, axis=-1)
    return x @ wfc.T


if __name__ == "__main__":
    # Small shapes consistent with the module.
    B, L = 2, 8
    d_model = 32
    n_hidden = 16
    n_head = 4

    key = jax.random.PRNGKey(0)
    ks = jax.random.split(key, 8)
    q = jax.random.normal(ks[0], (B, L, d_model), dtype=jnp.float32)
    k = jax.random.normal(ks[1], (B, L, d_model), dtype=jnp.float32)
    v = jax.random.normal(ks[2], (B, L, d_model), dtype=jnp.float32)

    # Deterministic parameter init (stacked per head).
    scale_p = 0.05
    wq = scale_p * jax.random.normal(ks[3], (n_head, n_hidden, d_model), dtype=jnp.float32)
    wk = scale_p * jax.random.normal(ks[4], (n_head, n_hidden, d_model), dtype=jnp.float32)
    wv = scale_p * jax.random.normal(ks[5], (n_head, n_hidden, d_model), dtype=jnp.float32)
    wfc = scale_p * jax.random.normal(ks[6], (d_model, n_head * n_hidden), dtype=jnp.float32)

    out = mha_pallas(q, k, v, wq, wk, wv, wfc)
    out = jax.block_until_ready(out)

    ref = mha_reference(q, k, v, wq, wk, wv, wfc)
    assert out.shape == (B, L, d_model)
    # slightly relaxed tolerance: softmax denominator uses the EUP approx reciprocal
    assert jnp.allclose(out, ref, atol=2e-3, rtol=2e-3)

    print("KERNEL_OK")
</pallas_src>

<mosaic_0001>
module attributes {stable_mosaic.version = 11 : i64} {
  func.func @_mha_kernel(%arg0: i32, %arg1: memref<1x8x32xf32, #tpu.memory_space<vmem>>, %arg2: memref<1x8x32xf32, #tpu.memory_space<vmem>>, %arg3: memref<1x8x32xf32, #tpu.memory_space<vmem>>, %arg4: memref<32x64xf32, #tpu.memory_space<vmem>>, %arg5: memref<32x64xf32, #tpu.memory_space<vmem>>, %arg6: memref<32x64xf32, #tpu.memory_space<vmem>>, %arg7: memref<64x32xf32, #tpu.memory_space<vmem>>, %arg8: memref<1x8x32xf32, #tpu.memory_space<vmem>>) attributes {dimension_semantics = [#tpu.dimension_semantics<parallel>], iteration_bounds = array<i64: 2>, scalar_prefetch = 0 : i64, scratch_operands = 0 : i64, tpu.core_type = #tpu.core_type<tc>, window_params = [{transform_indices = @transform_0, window_bounds = array<i64: 1, 8, 32>}, {transform_indices = @transform_1, window_bounds = array<i64: 1, 8, 32>}, {transform_indices = @transform_2, window_bounds = array<i64: 1, 8, 32>}, {pipeline_mode = #tpu.pipeline_mode<synchronous>, transform_indices = @transform_3, window_bounds = array<i64: 32, 64>}, {pipeline_mode = #tpu.pipeline_mode<synchronous>, transform_indices = @transform_4, window_bounds = array<i64: 32, 64>}, {pipeline_mode = #tpu.pipeline_mode<synchronous>, transform_indices = @transform_5, window_bounds = array<i64: 32, 64>}, {pipeline_mode = #tpu.pipeline_mode<synchronous>, transform_indices = @transform_6, window_bounds = array<i64: 64, 32>}, {transform_indices = @transform_7, window_bounds = array<i64: 1, 8, 32>}]} {
    %c0 = arith.constant 0 : index
    %c0_0 = arith.constant 0 : index
    %c0_1 = arith.constant 0 : index
    %0 = vector.load %arg1[%c0, %c0_0, %c0_1] : memref<1x8x32xf32, #tpu.memory_space<vmem>>, vector<1x8x32xf32>
    %1 = vector.shape_cast %0 : vector<1x8x32xf32> to vector<8x32xf32>
    %c0_2 = arith.constant 0 : index
    %c0_3 = arith.constant 0 : index
    %c0_4 = arith.constant 0 : index
    %2 = vector.load %arg2[%c0_2, %c0_3, %c0_4] : memref<1x8x32xf32, #tpu.memory_space<vmem>>, vector<1x8x32xf32>
    %3 = vector.shape_cast %2 : vector<1x8x32xf32> to vector<8x32xf32>
    %c0_5 = arith.constant 0 : index
    %c0_6 = arith.constant 0 : index
    %c0_7 = arith.constant 0 : index
    %4 = vector.load %arg3[%c0_5, %c0_6, %c0_7] : memref<1x8x32xf32, #tpu.memory_space<vmem>>, vector<1x8x32xf32>
    %5 = vector.shape_cast %4 : vector<1x8x32xf32> to vector<8x32xf32>
    %c0_8 = arith.constant 0 : index
    %c0_9 = arith.constant 0 : index
    %6 = vector.load %arg4[%c0_8, %c0_9] : memref<32x64xf32, #tpu.memory_space<vmem>>, vector<32x64xf32>
    %c0_10 = arith.constant 0 : index
    %c0_11 = arith.constant 0 : index
    %7 = vector.load %arg5[%c0_10, %c0_11] : memref<32x64xf32, #tpu.memory_space<vmem>>, vector<32x64xf32>
    %c0_12 = arith.constant 0 : index
    %c0_13 = arith.constant 0 : index
    %8 = vector.load %arg6[%c0_12, %c0_13] : memref<32x64xf32, #tpu.memory_space<vmem>>, vector<32x64xf32>
    %c0_14 = arith.constant 0 : index
    %c0_15 = arith.constant 0 : index
    %9 = vector.load %arg7[%c0_14, %c0_15] : memref<64x32xf32, #tpu.memory_space<vmem>>, vector<64x32xf32>
    %cst = arith.constant dense<0.000000e+00> : vector<8x64xf32>
    %10 = tpu.matmul %1, %6, %cst {dimension_numbers = #tpu.dot_dimension_numbers<[1], [0], [0], [1], [0, 0, 1, 1], [], []>} : vector<8x32xf32>, vector<32x64xf32>, vector<8x64xf32> -> vector<8x64xf32>
    %cst_16 = arith.constant dense<0.000000e+00> : vector<8x64xf32>
    %11 = tpu.matmul %3, %7, %cst_16 {dimension_numbers = #tpu.dot_dimension_numbers<[1], [0], [0], [1], [0, 0, 1, 1], [], []>} : vector<8x32xf32>, vector<32x64xf32>, vector<8x64xf32> -> vector<8x64xf32>
    %cst_17 = arith.constant dense<0.000000e+00> : vector<8x64xf32>
    %12 = tpu.matmul %5, %8, %cst_17 {dimension_numbers = #tpu.dot_dimension_numbers<[1], [0], [0], [1], [0, 0, 1, 1], [], []>} : vector<8x32xf32>, vector<32x64xf32>, vector<8x64xf32> -> vector<8x64xf32>
    %13 = vector.extract_strided_slice %10 {offsets = [0, 0], sizes = [8, 16], strides = [1, 1]} : vector<8x64xf32> to vector<8x16xf32>
    %14 = vector.extract_strided_slice %11 {offsets = [0, 0], sizes = [8, 16], strides = [1, 1]} : vector<8x64xf32> to vector<8x16xf32>
    %15 = vector.extract_strided_slice %12 {offsets = [0, 0], sizes = [8, 16], strides = [1, 1]} : vector<8x64xf32> to vector<8x16xf32>
    %cst_18 = arith.constant dense<0.000000e+00> : vector<8x8xf32>
    %16 = tpu.matmul %13, %14, %cst_18 {dimension_numbers = #tpu.dot_dimension_numbers<[1], [1], [0], [0], [0, 0, 1, 0], [], []>} : vector<8x16xf32>, vector<8x16xf32>, vector<8x8xf32> -> vector<8x8xf32>
    %cst_19 = arith.constant 2.500000e-01 : f32
    %17 = vector.broadcast %cst_19 : f32 to vector<8x8xf32>
    %18 = arith.mulf %16, %17 : vector<8x8xf32>
    %cst_20 = arith.constant dense<0xFF800000> : vector<8xf32>
    %19 = vector.multi_reduction <maximumf>, %18, %cst_20 [1] : vector<8x8xf32> to vector<8xf32>
    %20 = vector.shape_cast %19 : vector<8xf32> to vector<8x1xf32>
    %21 = vector.broadcast %20 : vector<8x1xf32> to vector<8x8xf32>
    %22 = arith.subf %18, %21 : vector<8x8xf32>
    %23 = math.exp %22 : vector<8x8xf32>
    %cst_21 = arith.constant dense<0.000000e+00> : vector<8xf32>
    %24 = vector.multi_reduction <add>, %23, %cst_21 [1] : vector<8x8xf32> to vector<8xf32>
    %25 = vector.shape_cast %24 : vector<8xf32> to vector<8x1xf32>
    %26 = tpu.reciprocal %25 {approx = true} : vector<8x1xf32> -> vector<8x1xf32>
    %27 = vector.broadcast %26 : vector<8x1xf32> to vector<8x8xf32>
    %28 = arith.mulf %23, %27 : vector<8x8xf32>
    %cst_22 = arith.constant dense<0.000000e+00> : vector<8x16xf32>
    %29 = tpu.matmul %28, %15, %cst_22 {dimension_numbers = #tpu.dot_dimension_numbers<[1], [0], [0], [1], [0, 0, 1, 1], [], []>} : vector<8x8xf32>, vector<8x16xf32>, vector<8x16xf32> -> vector<8x16xf32>
    %30 = vector.extract_strided_slice %10 {offsets = [0, 16], sizes = [8, 16], strides = [1, 1]} : vector<8x64xf32> to vector<8x16xf32>
    %31 = vector.extract_strided_slice %11 {offsets = [0, 16], sizes = [8, 16], strides = [1, 1]} : vector<8x64xf32> to vector<8x16xf32>
    %32 = vector.extract_strided_slice %12 {offsets = [0, 16], sizes = [8, 16], strides = [1, 1]} : vector<8x64xf32> to vector<8x16xf32>
    %cst_23 = arith.constant dense<0.000000e+00> : vector<8x8xf32>
    %33 = tpu.matmul %30, %31, %cst_23 {dimension_numbers = #tpu.dot_dimension_numbers<[1], [1], [0], [0], [0, 0, 1, 0], [], []>} : vector<8x16xf32>, vector<8x16xf32>, vector<8x8xf32> -> vector<8x8xf32>
    %cst_24 = arith.constant 2.500000e-01 : f32
    %34 = vector.broadcast %cst_24 : f32 to vector<8x8xf32>
    %35 = arith.mulf %33, %34 : vector<8x8xf32>
    %cst_25 = arith.constant dense<0xFF800000> : vector<8xf32>
    %36 = vector.multi_reduction <maximumf>, %35, %cst_25 [1] : vector<8x8xf32> to vector<8xf32>
    %37 = vector.shape_cast %36 : vector<8xf32> to vector<8x1xf32>
    %38 = vector.broadcast %37 : vector<8x1xf32> to vector<8x8xf32>
    %39 = arith.subf %35, %38 : vector<8x8xf32>
    %40 = math.exp %39 : vector<8x8xf32>
    %cst_26 = arith.constant dense<0.000000e+00> : vector<8xf32>
    %41 = vector.multi_reduction <add>, %40, %cst_26 [1] : vector<8x8xf32> to vector<8xf32>
    %42 = vector.shape_cast %41 : vector<8xf32> to vector<8x1xf32>
    %43 = tpu.reciprocal %42 {approx = true} : vector<8x1xf32> -> vector<8x1xf32>
    %44 = vector.broadcast %43 : vector<8x1xf32> to vector<8x8xf32>
    %45 = arith.mulf %40, %44 : vector<8x8xf32>
    %cst_27 = arith.constant dense<0.000000e+00> : vector<8x16xf32>
    %46 = tpu.matmul %45, %32, %cst_27 {dimension_numbers = #tpu.dot_dimension_numbers<[1], [0], [0], [1], [0, 0, 1, 1], [], []>} : vector<8x8xf32>, vector<8x16xf32>, vector<8x16xf32> -> vector<8x16xf32>
    %47 = vector.extract_strided_slice %10 {offsets = [0, 32], sizes = [8, 16], strides = [1, 1]} : vector<8x64xf32> to vector<8x16xf32>
    %48 = vector.extract_strided_slice %11 {offsets = [0, 32], sizes = [8, 16], strides = [1, 1]} : vector<8x64xf32> to vector<8x16xf32>
    %49 = vector.extract_strided_slice %12 {offsets = [0, 32], sizes = [8, 16], strides = [1, 1]} : vector<8x64xf32> to vector<8x16xf32>
    %cst_28 = arith.constant dense<0.000000e+00> : vector<8x8xf32>
    %50 = tpu.matmul %47, %48, %cst_28 {dimension_numbers = #tpu.dot_dimension_numbers<[1], [1], [0], [0], [0, 0, 1, 0], [], []>} : vector<8x16xf32>, vector<8x16xf32>, vector<8x8xf32> -> vector<8x8xf32>
    %cst_29 = arith.constant 2.500000e-01 : f32
    %51 = vector.broadcast %cst_29 : f32 to vector<8x8xf32>
    %52 = arith.mulf %50, %51 : vector<8x8xf32>
    %cst_30 = arith.constant dense<0xFF800000> : vector<8xf32>
    %53 = vector.multi_reduction <maximumf>, %52, %cst_30 [1] : vector<8x8xf32> to vector<8xf32>
    %54 = vector.shape_cast %53 : vector<8xf32> to vector<8x1xf32>
    %55 = vector.broadcast %54 : vector<8x1xf32> to vector<8x8xf32>
    %56 = arith.subf %52, %55 : vector<8x8xf32>
    %57 = math.exp %56 : vector<8x8xf32>
    %cst_31 = arith.constant dense<0.000000e+00> : vector<8xf32>
    %58 = vector.multi_reduction <add>, %57, %cst_31 [1] : vector<8x8xf32> to vector<8xf32>
    %59 = vector.shape_cast %58 : vector<8xf32> to vector<8x1xf32>
    %60 = tpu.reciprocal %59 {approx = true} : vector<8x1xf32> -> vector<8x1xf32>
    %61 = vector.broadcast %60 : vector<8x1xf32> to vector<8x8xf32>
    %62 = arith.mulf %57, %61 : vector<8x8xf32>
    %cst_32 = arith.constant dense<0.000000e+00> : vector<8x16xf32>
    %63 = tpu.matmul %62, %49, %cst_32 {dimension_numbers = #tpu.dot_dimension_numbers<[1], [0], [0], [1], [0, 0, 1, 1], [], []>} : vector<8x8xf32>, vector<8x16xf32>, vector<8x16xf32> -> vector<8x16xf32>
    %64 = vector.extract_strided_slice %10 {offsets = [0, 48], sizes = [8, 16], strides = [1, 1]} : vector<8x64xf32> to vector<8x16xf32>
    %65 = vector.extract_strided_slice %11 {offsets = [0, 48], sizes = [8, 16], strides = [1, 1]} : vector<8x64xf32> to vector<8x16xf32>
    %66 = vector.extract_strided_slice %12 {offsets = [0, 48], sizes = [8, 16], strides = [1, 1]} : vector<8x64xf32> to vector<8x16xf32>
    %cst_33 = arith.constant dense<0.000000e+00> : vector<8x8xf32>
    %67 = tpu.matmul %64, %65, %cst_33 {dimension_numbers = #tpu.dot_dimension_numbers<[1], [1], [0], [0], [0, 0, 1, 0], [], []>} : vector<8x16xf32>, vector<8x16xf32>, vector<8x8xf32> -> vector<8x8xf32>
    %cst_34 = arith.constant 2.500000e-01 : f32
    %68 = vector.broadcast %cst_34 : f32 to vector<8x8xf32>
    %69 = arith.mulf %67, %68 : vector<8x8xf32>
    %cst_35 = arith.constant dense<0xFF800000> : vector<8xf32>
    %70 = vector.multi_reduction <maximumf>, %69, %cst_35 [1] : vector<8x8xf32> to vector<8xf32>
    %71 = vector.shape_cast %70 : vector<8xf32> to vector<8x1xf32>
    %72 = vector.broadcast %71 : vector<8x1xf32> to vector<8x8xf32>
    %73 = arith.subf %69, %72 : vector<8x8xf32>
    %74 = math.exp %73 : vector<8x8xf32>
    %cst_36 = arith.constant dense<0.000000e+00> : vector<8xf32>
    %75 = vector.multi_reduction <add>, %74, %cst_36 [1] : vector<8x8xf32> to vector<8xf32>
    %76 = vector.shape_cast %75 : vector<8xf32> to vector<8x1xf32>
    %77 = tpu.reciprocal %76 {approx = true} : vector<8x1xf32> -> vector<8x1xf32>
    %78 = vector.broadcast %77 : vector<8x1xf32> to vector<8x8xf32>
    %79 = arith.mulf %74, %78 : vector<8x8xf32>
    %cst_37 = arith.constant dense<0.000000e+00> : vector<8x16xf32>
    %80 = tpu.matmul %79, %66, %cst_37 {dimension_numbers = #tpu.dot_dimension_numbers<[1], [0], [0], [1], [0, 0, 1, 1], [], []>} : vector<8x8xf32>, vector<8x16xf32>, vector<8x16xf32> -> vector<8x16xf32>
    %81 = tpu.concatenate %29, %46, %63, %80 in 1 : vector<8x16xf32>, vector<8x16xf32>, vector<8x16xf32>, vector<8x16xf32> -> vector<8x64xf32>
    %cst_38 = arith.constant dense<0.000000e+00> : vector<8x32xf32>
    %82 = tpu.matmul %81, %9, %cst_38 {dimension_numbers = #tpu.dot_dimension_numbers<[1], [0], [0], [1], [0, 0, 1, 1], [], []>} : vector<8x64xf32>, vector<64x32xf32>, vector<8x32xf32> -> vector<8x32xf32>
    %c0_39 = arith.constant 0 : index
    %c0_40 = arith.constant 0 : index
    %c0_41 = arith.constant 0 : index
    %83 = vector.load %arg8[%c0_39, %c0_40, %c0_41] : memref<1x8x32xf32, #tpu.memory_space<vmem>>, vector<1x8x32xf32>
    %84 = vector.shape_cast %83 : vector<1x8x32xf32> to vector<8x32xf32>
    %85 = vector.shape_cast %82 : vector<8x32xf32> to vector<1x8x32xf32>
    tpu.vector_store %arg8[%c0_39, %c0_40, %c0_41], %85 {strides = array<i32>} : memref<1x8x32xf32, #tpu.memory_space<vmem>>, vector<1x8x32xf32>,
    return
  }
  func.func @transform_0(%arg0: i32) -> (i32, i32, i32) {
    %c0_i32 = arith.constant 0 : i32
    %c0_i32_0 = arith.constant 0 : i32
    %c0_i32_1 = arith.constant 0 : i32
    return %arg0, %c0_i32, %c0_i32_0 : i32, i32, i32
  }
  func.func @transform_1(%arg0: i32) -> (i32, i32, i32) {
    %c0_i32 = arith.constant 0 : i32
    %c0_i32_0 = arith.constant 0 : i32
    %c0_i32_1 = arith.constant 0 : i32
    return %arg0, %c0_i32, %c0_i32_0 : i32, i32, i32
  }
  func.func @transform_2(%arg0: i32) -> (i32, i32, i32) {
    %c0_i32 = arith.constant 0 : i32
    %c0_i32_0 = arith.constant 0 : i32
    %c0_i32_1 = arith.constant 0 : i32
    return %arg0, %c0_i32, %c0_i32_0 : i32, i32, i32
  }
  func.func @transform_3(%arg0: i32) -> (i32, i32) {
    %c0_i32 = arith.constant 0 : i32
    %c0_i32_0 = arith.constant 0 : i32
    %c0_i32_1 = arith.constant 0 : i32
    return %c0_i32, %c0_i32_0 : i32, i32
  }
  func.func @transform_4(%arg0: i32) -> (i32, i32) {
    %c0_i32 = arith.constant 0 : i32
    %c0_i32_0 = arith.constant 0 : i32
    %c0_i32_1 = arith.constant 0 : i32
    return %c0_i32, %c0_i32_0 : i32, i32
  }
  func.func @transform_5(%arg0: i32) -> (i32, i32) {
    %c0_i32 = arith.constant 0 : i32
    %c0_i32_0 = arith.constant 0 : i32
    %c0_i32_1 = arith.constant 0 : i32
    return %c0_i32, %c0_i32_0 : i32, i32
  }
  func.func @transform_6(%arg0: i32) -> (i32, i32) {
    %c0_i32 = arith.constant 0 : i32
    %c0_i32_0 = arith.constant 0 : i32
    %c0_i32_1 = arith.constant 0 : i32
    return %c0_i32, %c0_i32_0 : i32, i32
  }
  func.func @transform_7(%arg0: i32) -> (i32, i32, i32) {
    %c0_i32 = arith.constant 0 : i32
    %c0_i32_0 = arith.constant 0 : i32
    %c0_i32_1 = arith.constant 0 : i32
    return %arg0, %c0_i32, %c0_i32_0 : i32, i32, i32
  }
}

</mosaic_0001>

<llo_original>
// kernel: tpu_custom_call.1
$region0: #{tpu_custom_call.1}
  #allocation0 [shape = 'u32[]', space=smem, size = 0x4, offset = 0x4, fixed_abs, tag = 'smem constant byte address 0x4 - core index']
  #allocation1 [shape = 'u32[144,128]{1,0:T(1,128)}', space=vmem, size = 0x12000, scoped, tag = 'internal scratch']
  %s0 = inlined_call_operand.hbm [shape: f32[2,8,32], index: 0, kind: input, shape index: {}]
  %s1 = inlined_call_operand.hbm [shape: f32[2,8,32], index: 1, kind: input, shape index: {}]
  %s2 = inlined_call_operand.hbm [shape: f32[2,8,32], index: 2, kind: input, shape index: {}]
  %s3 = inlined_call_operand.vmem [shape: f32[32,64], index: 3, kind: input, shape index: {}]
  %s4 = inlined_call_operand.vmem [shape: f32[32,64], index: 4, kind: input, shape index: {}]
  %s5 = inlined_call_operand.vmem [shape: f32[32,64], index: 5, kind: input, shape index: {}]
  %s6 = inlined_call_operand.vmem [shape: f32[64,32], index: 6, kind: input, shape index: {}]
  %s7 = inlined_call_operand.hbm [shape: f32[2,8,32], index: 7, kind: output, shape index: {}]
  %s8 = sld [smem:[#allocation0]]
  $region73: #{tpu_custom_call.1} parent=0
    _
  %s10 = ssub.s32 1, %s8
  %s11 = scalar_select 0, %s10, %s8
  $region1: #{tpu_custom_call.1} parent=0
    #allocation2 [shape = 'u8[8192]{0}', space=vmem, size = 0x2000, scoped, tag = 'input window, operand 0']
    #allocation3 [shape = 's32[2]{0}', space=sflag, size = 0x8, scoped, tag = 'scoped memory for tpu_custom_call.1']
    #allocation4 [shape = 's32[2]{0}', space=sflag, size = 0x8, scoped, tag = 'scoped memory for tpu_custom_call.1']
    #allocation5 [shape = 'u8[8192]{0}', space=vmem, size = 0x2000, scoped, tag = 'input window, operand 1']
    #allocation6 [shape = 's32[2]{0}', space=sflag, size = 0x8, scoped, tag = 'scoped memory for tpu_custom_call.1']
    #allocation7 [shape = 'u8[8192]{0}', space=vmem, size = 0x2000, scoped, tag = 'input window, operand 2']
    #allocation8 [shape = 'u8[8192]{0}', space=vmem, size = 0x2000, scoped, tag = 'output window, operand 0']
    %12 = vsyncpa [#allocation3], 0
    %s13 = scalar_lea.sflag [#allocation3], 1
    %14 = vsyncpa %s13, 0
    %15 = vsyncpa [#allocation6], 0
    %s16 = scalar_lea.sflag [#allocation6], 1
    %17 = vsyncpa %s16, 0
    %18 = vsyncpa [#allocation4], 0
    %s19 = scalar_lea.sflag [#allocation4], 1
    %20 = vsyncpa %s19, 0
    loop: start=0, step=1, limit=4
    $region2: #{tpu_custom_call.1} parent=1 // loop_pre_header
      _
    $region3: #{tpu_custom_call.1} parent=1 // loop_header
      %s22 = sphi 0, %s26
      %p23 = scmp.ge.s32.totalorder %s22, 4
      %s32 = sphi 0, %s34
      %s35 = sphi 0, %s32
      %s36 = sphi 0, %s35
      %s52 = sphi 0, %s36
      %s58 = sphi 0, %s60
      %s61 = sphi 0, %s58
      %s62 = sphi 0, %s61
      %s78 = sphi 0, %s62
      %s84 = sphi 0, %s86
      %s87 = sphi 0, %s84
      %s88 = sphi 0, %s87
      %s104 = sphi 0, %s88
      %s108 = sphi 0, %s108
      %s110 = sphi 0, %s108
      %s111 = sphi 0, %s110
      %s125 = sphi 0, %s111
      %s129 = sphi 0, %s129
      %s131 = sphi 0, %s129
      %s132 = sphi 0, %s131
      %s146 = sphi 0, %s132
      %s150 = sphi 0, %s150
      %s152 = sphi 0, %s150
      %s153 = sphi 0, %s152
      %s167 = sphi 0, %s153
      %s171 = sphi 0, %s171
      %s173 = sphi 0, %s171
      %s174 = sphi 0, %s173
      %s188 = sphi 0, %s174
      %s194 = sphi 0, %s196
      %s197 = sphi 0, %s194
      %s198 = sphi 0, %s197
      %s214 = sphi 0, %s198
    $region4: #{tpu_custom_call.1} parent=1 // loop_header_branch
      %25 = sbr.rel (%p23) target = $region8
    $region5: #{tpu_custom_call.1} parent=1 // loop_body
      %s27 = ssub.s32 %s22, 1
      %s28 = ssub.s32 %s22, 2
      %s29 = sadd.s32 %s22, 1
      %s30 = ssub.s32 %s22, %s29
      %p31 = scmp.eq.s32.totalorder %s30, 0
      %s33 = sadd.s32 %s32, 1
      %s34 = scalar_select %p31, %s32, %s33
      %p37 = pneg %p31
      %p38 = scmp.eq.s32.totalorder %s22, 1
      %p39 = por %p37, %p38
      %p40 = scmp.ne.s32.totalorder %s32, %s35
      %p41 = scmp.eq.s32.totalorder %s22, 0
      %p42 = por %p40, %p41
      %p43 = scmp.ne.s32.totalorder %s32, %s35
      %p44 = scmp.eq.s32.totalorder %s27, 1
      %p45 = por %p43, %p44
      %p46 = scmp.ne.s32.totalorder %s35, %s36
      %p47 = scmp.eq.s32.totalorder %s27, 0
      %p48 = por %p46, %p47
      %p49 = scmp.ne.s32.totalorder %s35, %s36
      %p50 = scmp.eq.s32.totalorder %s28, 1
      %p51 = por %p49, %p50
      %p53 = scmp.ne.s32.totalorder %s36, %s52
      %p54 = scmp.eq.s32.totalorder %s28, 0
      %p55 = por %p53, %p54
      %s56 = ssub.s32 %s22, %s29
      %p57 = scmp.eq.s32.totalorder %s56, 0
      %s59 = sadd.s32 %s58, 1
      %s60 = scalar_select %p57, %s58, %s59
      %p63 = pneg %p57
      %p64 = scmp.eq.s32.totalorder %s22, 1
      %p65 = por %p63, %p64
      %p66 = scmp.ne.s32.totalorder %s58, %s61
      %p67 = scmp.eq.s32.totalorder %s22, 0
      %p68 = por %p66, %p67
      %p69 = scmp.ne.s32.totalorder %s58, %s61
      %p70 = scmp.eq.s32.totalorder %s27, 1
      %p71 = por %p69, %p70
      %p72 = scmp.ne.s32.totalorder %s61, %s62
      %p73 = scmp.eq.s32.totalorder %s27, 0
      %p74 = por %p72, %p73
      %p75 = scmp.ne.s32.totalorder %s61, %s62
      %p76 = scmp.eq.s32.totalorder %s28, 1
      %p77 = por %p75, %p76
      %p79 = scmp.ne.s32.totalorder %s62, %s78
      %p80 = scmp.eq.s32.totalorder %s28, 0
      %p81 = por %p79, %p80
      %s82 = ssub.s32 %s22, %s29
      %p83 = scmp.eq.s32.totalorder %s82, 0
      %s85 = sadd.s32 %s84, 1
      %s86 = scalar_select %p83, %s84, %s85
      %p89 = pneg %p83
      %p90 = scmp.eq.s32.totalorder %s22, 1
      %p91 = por %p89, %p90
      %p92 = scmp.ne.s32.totalorder %s84, %s87
      %p93 = scmp.eq.s32.totalorder %s22, 0
      %p94 = por %p92, %p93
      %p95 = scmp.ne.s32.totalorder %s84, %s87
      %p96 = scmp.eq.s32.totalorder %s27, 1
      %p97 = por %p95, %p96
      %p98 = scmp.ne.s32.totalorder %s87, %s88
      %p99 = scmp.eq.s32.totalorder %s27, 0
      %p100 = por %p98, %p99
      %p101 = scmp.ne.s32.totalorder %s87, %s88
      %p102 = scmp.eq.s32.totalorder %s28, 1
      %p103 = por %p101, %p102
      %p105 = scmp.ne.s32.totalorder %s88, %s104
      %p106 = scmp.eq.s32.totalorder %s28, 0
      %p107 = por %p105, %p106
      %s109 = sadd.s32 %s108, 1
      %p112 = scmp.eq.s32.totalorder %s22, 1
      %p113 = scmp.ne.s32.totalorder %s108, %s110
      %p114 = scmp.eq.s32.totalorder %s22, 0
      %p115 = por %p113, %p114
      %p116 = scmp.ne.s32.totalorder %s108, %s110
      %p117 = scmp.eq.s32.totalorder %s27, 1
      %p118 = por %p116, %p117
      %p119 = scmp.ne.s32.totalorder %s110, %s111
      %p120 = scmp.eq.s32.totalorder %s27, 0
      %p121 = por %p119, %p120
      %p122 = scmp.ne.s32.totalorder %s110, %s111
      %p123 = scmp.eq.s32.totalorder %s28, 1
      %p124 = por %p122, %p123
      %p126 = scmp.ne.s32.totalorder %s111, %s125
      %p127 = scmp.eq.s32.totalorder %s28, 0
      %p128 = por %p126, %p127
      %s130 = sadd.s32 %s129, 1
      %p133 = scmp.eq.s32.totalorder %s22, 1
      %p134 = scmp.ne.s32.totalorder %s129, %s131
      %p135 = scmp.eq.s32.totalorder %s22, 0
      %p136 = por %p134, %p135
      %p137 = scmp.ne.s32.totalorder %s129, %s131
      %p138 = scmp.eq.s32.totalorder %s27, 1
      %p139 = por %p137, %p138
      %p140 = scmp.ne.s32.totalorder %s131, %s132
      %p141 = scmp.eq.s32.totalorder %s27, 0
      %p142 = por %p140, %p141
      %p143 = scmp.ne.s32.totalorder %s131, %s132
      %p144 = scmp.eq.s32.totalorder %s28, 1
      %p145 = por %p143, %p144
      %p147 = scmp.ne.s32.totalorder %s132, %s146
      %p148 = scmp.eq.s32.totalorder %s28, 0
      %p149 = por %p147, %p148
      %s151 = sadd.s32 %s150, 1
      %p154 = scmp.eq.s32.totalorder %s22, 1
      %p155 = scmp.ne.s32.totalorder %s150, %s152
      %p156 = scmp.eq.s32.totalorder %s22, 0
      %p157 = por %p155, %p156
      %p158 = scmp.ne.s32.totalorder %s150, %s152
      %p159 = scmp.eq.s32.totalorder %s27, 1
      %p160 = por %p158, %p159
      %p161 = scmp.ne.s32.totalorder %s152, %s153
      %p162 = scmp.eq.s32.totalorder %s27, 0
      %p163 = por %p161, %p162
      %p164 = scmp.ne.s32.totalorder %s152, %s153
      %p165 = scmp.eq.s32.totalorder %s28, 1
      %p166 = por %p164, %p165
      %p168 = scmp.ne.s32.totalorder %s153, %s167
      %p169 = scmp.eq.s32.totalorder %s28, 0
      %p170 = por %p168, %p169
      %s172 = sadd.s32 %s171, 1
      %p175 = scmp.eq.s32.totalorder %s22, 1
      %p176 = scmp.ne.s32.totalorder %s171, %s173
      %p177 = scmp.eq.s32.totalorder %s22, 0
      %p178 = por %p176, %p177
      %p179 = scmp.ne.s32.totalorder %s171, %s173
      %p180 = scmp.eq.s32.totalorder %s27, 1
      %p181 = por %p179, %p180
      %p182 = scmp.ne.s32.totalorder %s173, %s174
      %p183 = scmp.eq.s32.totalorder %s27, 0
      %p184 = por %p182, %p183
      %p185 = scmp.ne.s32.totalorder %s173, %s174
      %p186 = scmp.eq.s32.totalorder %s28, 1
      %p187 = por %p185, %p186
      %p189 = scmp.ne.s32.totalorder %s174, %s188
      %p190 = scmp.eq.s32.totalorder %s28, 0
      %p191 = por %p189, %p190
      %s192 = ssub.s32 %s22, %s29
      %p193 = scmp.eq.s32.totalorder %s192, 0
      %s195 = sadd.s32 %s194, 1
      %s196 = scalar_select %p193, %s194, %s195
      %p199 = pneg %p193
      %p200 = scmp.eq.s32.totalorder %s22, 1
      %p201 = por %p199, %p200
      %p202 = scmp.ne.s32.totalorder %s194, %s197
      %p203 = scmp.eq.s32.totalorder %s22, 0
      %p204 = por %p202, %p203
      %p205 = scmp.ne.s32.totalorder %s194, %s197
      %p206 = scmp.eq.s32.totalorder %s27, 1
      %p207 = por %p205, %p206
      %p208 = scmp.ne.s32.totalorder %s197, %s198
      %p209 = scmp.eq.s32.totalorder %s27, 0
      %p210 = por %p208, %p209
      %p211 = scmp.ne.s32.totalorder %s197, %s198
      %p212 = scmp.eq.s32.totalorder %s28, 1
      %p213 = por %p211, %p212
      %p215 = scmp.ne.s32.totalorder %s198, %s214
      %p216 = scmp.eq.s32.totalorder %s28, 0
      %p217 = por %p215, %p216
      %p218 = scmp.le.s32.totalorder 1, %s22
      %p219 = scmp.lt.s32.totalorder %s22, 3
      %p220 = pnand %p218, %p219
      %p221 = pneg %p220
      // Predicated region
      $region9: #{tpu_custom_call.1} parent=5 // pred_check
        _
      $region10: #{tpu_custom_call.1} parent=5 // pred_check_branch
        %223 = sbr.rel (%p220) target = $region12
      $region11: #{tpu_custom_call.1} parent=5 // pred_region
        %s224 = ssub.s32 %s22, 1
        // Predicated region
        $region13: #{tpu_custom_call.1} parent=11 // pred_check
          %p225 = pneg %p121
        $region14: #{tpu_custom_call.1} parent=11 // pred_check_branch
          %227 = sbr.rel (%p225) target = $region16
        $region15: #{tpu_custom_call.1} parent=11 // pred_region
          _
        $region16: #{tpu_custom_call.1} parent=11 // pred_fallthru
          _
        // Predicated region
        $region17: #{tpu_custom_call.1} parent=11 // pred_check
          %p228 = pneg %p142
        $region18: #{tpu_custom_call.1} parent=11 // pred_check_branch
          %230 = sbr.rel (%p228) target = $region20
        $region19: #{tpu_custom_call.1} parent=11 // pred_region
          _
        $region20: #{tpu_custom_call.1} parent=11 // pred_fallthru
          _
        // Predicated region
        $region21: #{tpu_custom_call.1} parent=11 // pred_check
          %p231 = pneg %p163
        $region22: #{tpu_custom_call.1} parent=11 // pred_check_branch
          %233 = sbr.rel (%p231) target = $region24
        $region23: #{tpu_custom_call.1} parent=11 // pred_region
          _
        $region24: #{tpu_custom_call.1} parent=11 // pred_fallthru
          _
        // Predicated region
        $region25: #{tpu_custom_call.1} parent=11 // pred_check
          %p234 = pneg %p184
        $region26: #{tpu_custom_call.1} parent=11 // pred_check_branch
          %236 = sbr.rel (%p234) target = $region28
        $region27: #{tpu_custom_call.1} parent=11 // pred_region
          _
        $region28: #{tpu_custom_call.1} parent=11 // pred_fallthru
          _
      $region12: #{tpu_custom_call.1} parent=5 // pred_fallthru
        _
      %p237 = scmp.lt.s32.totalorder %s22, 2
      // Predicated region
      $region29: #{tpu_custom_call.1} parent=5 // pred_check
        %p238 = pneg %p237
      $region30: #{tpu_custom_call.1} parent=5 // pred_check_branch
        %240 = sbr.rel (%p238) target = $region32
      $region31: #{tpu_custom_call.1} parent=5 // pred_region
        // Predicated region
        $region33: #{tpu_custom_call.1} parent=31 // pred_check
          %p241 = pneg %p42
        $region34: #{tpu_custom_call.1} parent=31 // pred_check_branch
          %243 = sbr.rel (%p241) target = $region36
        $region35: #{tpu_custom_call.1} parent=31 // pred_region
          %s244 = sand.u32 %s32, 1
          %s245 = scalar_lea.sflag [#allocation3], %s244
          %s246 = sand.u32 %s32, 1
          %s247 = smul.addr %s246, 8
          %s248 = scalar_lea.vmem [#allocation2], %s247
          %s250 = ssub.s32 128, 128
          %251 = vsyncadd %s245, %s250
          %s252 = smul.addr %s22, 128
          %s253 = scalar_lea.hbm %s0, %s252
          %s255 = sshll.u32 %s248, 4
          %s256 = int_to_ptr.vmem [resolvable:$true] %s255
          %258 = dma.hbm_to_vmem [thread:$0]  %s253, 128, %s256, %s245
        $region36: #{tpu_custom_call.1} parent=31 // pred_fallthru
          _
        // Predicated region
        $region37: #{tpu_custom_call.1} parent=31 // pred_check
          %p259 = pneg %p68
        $region38: #{tpu_custom_call.1} parent=31 // pred_check_branch
          %261 = sbr.rel (%p259) target = $region40
        $region39: #{tpu_custom_call.1} parent=31 // pred_region
          %s262 = sand.u32 %s22, 1
          %s263 = scalar_lea.sflag [#allocation6], %s262
          %s264 = sand.u32 %s58, 1
          %s265 = smul.addr %s264, 8
          %s266 = scalar_lea.vmem [#allocation5], %s265
          %s268 = ssub.s32 128, 128
          %269 = vsyncadd %s263, %s268
          %s270 = smul.addr %s22, 128
          %s271 = scalar_lea.hbm %s1, %s270
          %s273 = sshll.u32 %s266, 4
          %s274 = int_to_ptr.vmem [resolvable:$true] %s273
          %276 = dma.hbm_to_vmem [thread:$0]  %s271, 128, %s274, %s263
        $region40: #{tpu_custom_call.1} parent=31 // pred_fallthru
          _
        // Predicated region
        $region41: #{tpu_custom_call.1} parent=31 // pred_check
          %p277 = pneg %p94
        $region42: #{tpu_custom_call.1} parent=31 // pred_check_branch
          %279 = sbr.rel (%p277) target = $region44
        $region43: #{tpu_custom_call.1} parent=31 // pred_region
          %s280 = sand.u32 %s22, 1
          %s281 = scalar_lea.sflag [#allocation6], %s280
          %s282 = sand.u32 %s84, 1
          %s283 = smul.addr %s282, 8
          %s284 = scalar_lea.vmem [#allocation7], %s283
          %s286 = ssub.s32 128, 128
          %287 = vsyncadd %s281, %s286
          %s288 = smul.addr %s22, 128
          %s289 = scalar_lea.hbm %s2, %s288
          %s291 = sshll.u32 %s284, 4
          %s292 = int_to_ptr.vmem [resolvable:$true] %s291
          %294 = dma.hbm_to_vmem [thread:$0]  %s289, 128, %s292, %s281
        $region44: #{tpu_custom_call.1} parent=31 // pred_fallthru
          _
      $region32: #{tpu_custom_call.1} parent=5 // pred_fallthru
        _
      %p295 = scmp.le.s32.totalorder 1, %s22
      %p296 = scmp.lt.s32.totalorder %s22, 3
      %p297 = pnand %p295, %p296
      %p298 = pneg %p297
      // Predicated region
      $region45: #{tpu_custom_call.1} parent=5 // pred_check
        _
      $region46: #{tpu_custom_call.1} parent=5 // pred_check_branch
        %300 = sbr.rel (%p297) target = $region48
      $region47: #{tpu_custom_call.1} parent=5 // pred_region
        %s301 = ssub.s32 %s22, 1
        %s302 = sand.u32 %s35, 1
        %s303 = scalar_lea.sflag [#allocation3], %s302
        %s304 = sand.u32 %s35, 1
        %s305 = smul.addr %s304, 8
        %s306 = scalar_lea.vmem [#allocation2], %s305
        // Predicated region
        $region49: #{tpu_custom_call.1} parent=47 // pred_check
          %p307 = pneg %p48
        $region50: #{tpu_custom_call.1} parent=47 // pred_check_branch
          %309 = sbr.rel (%p307) target = $region52
        $region51: #{tpu_custom_call.1} parent=47 // pred_region
          %310 = dma.done %s303, 128
        $region52: #{tpu_custom_call.1} parent=47 // pred_fallthru
          _
        %s311 = sand.u32 %s27, 1
        %s312 = scalar_lea.sflag [#allocation6], %s311
        %s313 = sand.u32 %s61, 1
        %s314 = smul.addr %s313, 8
        %s315 = scalar_lea.vmem [#allocation5], %s314
        // Predicated region
        $region53: #{tpu_custom_call.1} parent=47 // pred_check
          %p316 = pneg %p74
        $region54: #{tpu_custom_call.1} parent=47 // pred_check_branch
          %318 = sbr.rel (%p316) target = $region56
        $region55: #{tpu_custom_call.1} parent=47 // pred_region
          %319 = dma.done %s312, 128
        $region56: #{tpu_custom_call.1} parent=47 // pred_fallthru
          _
        %s320 = sand.u32 %s27, 1
        %s321 = scalar_lea.sflag [#allocation6], %s320
        %s322 = sand.u32 %s87, 1
        %s323 = smul.addr %s322, 8
        %s324 = scalar_lea.vmem [#allocation7], %s323
        // Predicated region
        $region57: #{tpu_custom_call.1} parent=47 // pred_check
          %p325 = pneg %p100
        $region58: #{tpu_custom_call.1} parent=47 // pred_check_branch
          %327 = sbr.rel (%p325) target = $region60
        $region59: #{tpu_custom_call.1} parent=47 // pred_region
          %328 = dma.done %s321, 128
        $region60: #{tpu_custom_call.1} parent=47 // pred_fallthru
          _
        %s329 = sand.u32 %s35, 1
        %s330 = scalar_lea.sflag [#allocation3], %s329
        %s331 = sand.u32 %s35, 1
        %s332 = smul.addr %s331, 8
        %s333 = scalar_lea.vmem [#allocation2], %s332
        %p334 = pneg %p48
        %p335 = pneg %p45
        %s336 = sand.u32 %s27, 1
        %s337 = scalar_lea.sflag [#allocation6], %s336
        %s338 = sand.u32 %s61, 1
        %s339 = smul.addr %s338, 8
        %s340 = scalar_lea.vmem [#allocation5], %s339
        %p341 = pneg %p74
        %p342 = pneg %p71
        %s343 = sand.u32 %s27, 1
        %s344 = scalar_lea.sflag [#allocation6], %s343
        %s345 = sand.u32 %s87, 1
        %s346 = smul.addr %s345, 8
        %s347 = scalar_lea.vmem [#allocation7], %s346
        %p348 = pneg %p100
        %p349 = pneg %p97
        %p350 = pneg %p121
        %p351 = pneg %p118
        %p352 = pneg %p142
        %p353 = pneg %p139
        %p354 = pneg %p163
        %p355 = pneg %p160
        %p356 = pneg %p184
        %p357 = pneg %p181
        %p358 = pneg %p210
        %p359 = pneg %p207
        %s360 = sand.u32 %s197, 1
        %s361 = scalar_lea.sflag [#allocation4], %s360
        %s362 = sand.u32 %s197, 1
        %s363 = smul.addr %s362, 8
        %s364 = scalar_lea.vmem [#allocation8], %s363
        %v365 = vld [vmem:[%s306] sm:$0xff]
        %v366 = vld [vmem:[%s315] sm:$0xff]
        %v367 = vld [vmem:[%s324] sm:$0xff]
        %v368 = vld [vmem:[%s3] sm:$0xff]
        %v369 = vld [vmem:[%s3 + $0x8] sm:$0xff]
        %v370 = vld [vmem:[%s3 + $0x10] sm:$0xff]
        %v371 = vld [vmem:[%s3 + $0x18] sm:$0xff]
        %v372 = vld [vmem:[%s4] sm:$0xff]
        %v373 = vld [vmem:[%s4 + $0x8] sm:$0xff]
        %v374 = vld [vmem:[%s4 + $0x10] sm:$0xff]
        %v375 = vld [vmem:[%s4 + $0x18] sm:$0xff]
        %v376 = vld [vmem:[%s5] sm:$0xff]
        %v377 = vld [vmem:[%s5 + $0x8] sm:$0xff]
        %v378 = vld [vmem:[%s5 + $0x10] sm:$0xff]
        %v379 = vld [vmem:[%s5 + $0x18] sm:$0xff]
        %v380 = vld [vmem:[%s6] sm:$0xff]
        %v381 = vld [vmem:[%s6 + $0x8] sm:$0xff]
        %v382 = vld [vmem:[%s6 + $0x10] sm:$0xff]
        %v383 = vld [vmem:[%s6 + $0x18] sm:$0xff]
        %v384 = vld [vmem:[%s6 + $0x20] sm:$0xff]
        %v385 = vld [vmem:[%s6 + $0x28] sm:$0xff]
        %v386 = vld [vmem:[%s6 + $0x30] sm:$0xff]
        %v387 = vld [vmem:[%s6 + $0x38] sm:$0xff]
        %vm388 = vcmask 261120
        %v390 = vsel %vm388, %v365, 0
        %392 = vmatprep.subr.mxu0 0.0
        %393 = vmatpush1.msra.mxu0 %v368
        %394 = vmatprep.subr.mxu0 0.0
        %395 = vmatpush1.msra.mxu0 %v369
        %396 = vmatprep.subr.mxu0 0.0
        %397 = vmatpush1.msra.mxu0 %v370
        %398 = vmatprep.subr.mxu0 0.0
        %399 = vmatpush1.msra.mxu0 %v371
        %400 = vmatprep.subr.mxu0 0.0
        %401 = vmatpush1.msra.mxu0 0.0
        %402 = vmatprep.subr.mxu0 0.0
        %403 = vmatpush1.msra.mxu0 0.0
        %404 = vmatprep.subr.mxu0 0.0
        %405 = vmatpush1.msra.mxu0 0.0
        %406 = vmatprep.subr.mxu0 0.0
        %407 = vmatpush1.msra.mxu0 0.0
        %408 = vmatprep.subr.mxu0 0.0
        %409 = vmatpush1.msra.mxu0 0.0
        %410 = vmatprep.subr.mxu0 0.0
        %411 = vmatpush1.msra.mxu0 0.0
        %412 = vmatprep.subr.mxu0 0.0
        %413 = vmatpush1.msra.mxu0 0.0
        %414 = vmatprep.subr.mxu0 0.0
        %415 = vmatpush1.msra.mxu0 0.0
        %416 = vmatprep.subr.mxu0 0.0
        %417 = vmatpush1.msra.mxu0 0.0
        %418 = vmatprep.subr.mxu0 0.0
        %419 = vmatpush1.msra.mxu0 0.0
        %420 = vmatprep.subr.mxu0 0.0
        %421 = vmatpush1.msra.mxu0 0.0
        %422 = vmatprep.subr.mxu0 0.0
        %423 = vmatpush1.msra.mxu0 0.0
        %424 = vmatprep.subr.mxu0 0.0
        %425 = vmatpush1.msra.mxu0 0.0
        %426 = vmatprep.subr.mxu0 0.0
        %427 = vmatpush1.msra.mxu0 0.0
        %428 = vmatprep.subr.mxu0 0.0
        %429 = vmatpush1.msra.mxu0 0.0
        %430 = vmatprep.subr.mxu0 0.0
        %431 = vmatpush1.msra.mxu0 0.0
        %432 = vmatprep.subr.mxu0 0.0
        %433 = vmatpush1.msra.mxu0 0.0
        %434 = vmatprep.subr.mxu0 0.0
        %435 = vmatpush1.msra.mxu0 0.0
        %436 = vmatprep.subr.mxu0 0.0
        %437 = vmatpush1.msra.mxu0 0.0
        %438 = vmatprep.subr.mxu0 0.0
        %439 = vmatpush1.msra.mxu0 0.0
        %440 = vmatprep.subr.mxu0 0.0
        %441 = vmatpush1.msra.mxu0 0.0
        %442 = vmatprep.subr.mxu0 0.0
        %443 = vmatpush1.msra.mxu0 0.0
        %444 = vmatprep.subr.mxu0 0.0
        %445 = vmatpush1.msra.mxu0 0.0
        %446 = vmatprep.subr.mxu0 0.0
        %447 = vmatpush1.msra.mxu0 0.0
        %448 = vmatprep.subr.mxu0 0.0
        %449 = vmatpush1.msra.mxu0 0.0
        %450 = vmatprep.subr.mxu0 0.0
        %451 = vmatpush1.msra.mxu0 0.0
        %452 = vmatprep.subr.mxu0 0.0
        %453 = vmatpush1.msra.mxu0 0.0
        %454 = vmatprep.subr.mxu0 0.0
        %455 = vmatpush1.msra.mxu0 0.0
        %456 = vmatprep.mubr.f32.mxu0 0.0
        %457 = vmatmul.mubr.f32.gmra.mrb[0].mxu0 %v390
        %v458 = vpop.f32.mrb[0].mxu0
        %v459 = vadd.f32 0.0, %v458
        %v460 = vpop.f32.mrb[0].mxu0
        %461 = vdwg.mxu0
        %v463 = vsel %vm388, %v366, 0
        %465 = vmatprep.subr.mxu0 0.0
        %466 = vmatpush1.msra.mxu0 %v372
        %467 = vmatprep.subr.mxu0 0.0
        %468 = vmatpush1.msra.mxu0 %v373
        %469 = vmatprep.subr.mxu0 0.0
        %470 = vmatpush1.msra.mxu0 %v374
        %471 = vmatprep.subr.mxu0 0.0
        %472 = vmatpush1.msra.mxu0 %v375
        %473 = vmatprep.subr.mxu0 0.0
        %474 = vmatpush1.msra.mxu0 0.0
        %475 = vmatprep.subr.mxu0 0.0
        %476 = vmatpush1.msra.mxu0 0.0
        %477 = vmatprep.subr.mxu0 0.0
        %478 = vmatpush1.msra.mxu0 0.0
        %479 = vmatprep.subr.mxu0 0.0
        %480 = vmatpush1.msra.mxu0 0.0
        %481 = vmatprep.subr.mxu0 0.0
        %482 = vmatpush1.msra.mxu0 0.0
        %483 = vmatprep.subr.mxu0 0.0
        %484 = vmatpush1.msra.mxu0 0.0
        %485 = vmatprep.subr.mxu0 0.0
        %486 = vmatpush1.msra.mxu0 0.0
        %487 = vmatprep.subr.mxu0 0.0
        %488 = vmatpush1.msra.mxu0 0.0
        %489 = vmatprep.subr.mxu0 0.0
        %490 = vmatpush1.msra.mxu0 0.0
        %491 = vmatprep.subr.mxu0 0.0
        %492 = vmatpush1.msra.mxu0 0.0
        %493 = vmatprep.subr.mxu0 0.0
        %494 = vmatpush1.msra.mxu0 0.0
        %495 = vmatprep.subr.mxu0 0.0
        %496 = vmatpush1.msra.mxu0 0.0
        %497 = vmatprep.subr.mxu0 0.0
        %498 = vmatpush1.msra.mxu0 0.0
        %499 = vmatprep.subr.mxu0 0.0
        %500 = vmatpush1.msra.mxu0 0.0
        %501 = vmatprep.subr.mxu0 0.0
        %502 = vmatpush1.msra.mxu0 0.0
        %503 = vmatprep.subr.mxu0 0.0
        %504 = vmatpush1.msra.mxu0 0.0
        %505 = vmatprep.subr.mxu0 0.0
        %506 = vmatpush1.msra.mxu0 0.0
        %507 = vmatprep.subr.mxu0 0.0
        %508 = vmatpush1.msra.mxu0 0.0
        %509 = vmatprep.subr.mxu0 0.0
        %510 = vmatpush1.msra.mxu0 0.0
        %511 = vmatprep.subr.mxu0 0.0
        %512 = vmatpush1.msra.mxu0 0.0
        %513 = vmatprep.subr.mxu0 0.0
        %514 = vmatpush1.msra.mxu0 0.0
        %515 = vmatprep.subr.mxu0 0.0
        %516 = vmatpush1.msra.mxu0 0.0
        %517 = vmatprep.subr.mxu0 0.0
        %518 = vmatpush1.msra.mxu0 0.0
        %519 = vmatprep.subr.mxu0 0.0
        %520 = vmatpush1.msra.mxu0 0.0
        %521 = vmatprep.subr.mxu0 0.0
        %522 = vmatpush1.msra.mxu0 0.0
        %523 = vmatprep.subr.mxu0 0.0
        %524 = vmatpush1.msra.mxu0 0.0
        %525 = vmatprep.subr.mxu0 0.0
        %526 = vmatpush1.msra.mxu0 0.0
        %527 = vmatprep.subr.mxu0 0.0
        %528 = vmatpush1.msra.mxu0 0.0
        %529 = vmatprep.mubr.f32.mxu0 0.0
        %530 = vmatmul.mubr.f32.gmra.mrb[0].mxu0 %v463
        %v531 = vpop.f32.mrb[0].mxu0
        %v532 = vadd.f32 0.0, %v531
        %v533 = vpop.f32.mrb[0].mxu0
        %534 = vdwg.mxu0
        %v536 = vsel %vm388, %v367, 0
        %538 = vmatprep.subr.mxu0 0.0
        %539 = vmatpush1.msra.mxu0 %v376
        %540 = vmatprep.subr.mxu0 0.0
        %541 = vmatpush1.msra.mxu0 %v377
        %542 = vmatprep.subr.mxu0 0.0
        %543 = vmatpush1.msra.mxu0 %v378
        %544 = vmatprep.subr.mxu0 0.0
        %545 = vmatpush1.msra.mxu0 %v379
        %546 = vmatprep.subr.mxu0 0.0
        %547 = vmatpush1.msra.mxu0 0.0
        %548 = vmatprep.subr.mxu0 0.0
        %549 = vmatpush1.msra.mxu0 0.0
        %550 = vmatprep.subr.mxu0 0.0
        %551 = vmatpush1.msra.mxu0 0.0
        %552 = vmatprep.subr.mxu0 0.0
        %553 = vmatpush1.msra.mxu0 0.0
        %554 = vmatprep.subr.mxu0 0.0
        %555 = vmatpush1.msra.mxu0 0.0
        %556 = vmatprep.subr.mxu0 0.0
        %557 = vmatpush1.msra.mxu0 0.0
        %558 = vmatprep.subr.mxu0 0.0
        %559 = vmatpush1.msra.mxu0 0.0
        %560 = vmatprep.subr.mxu0 0.0
        %561 = vmatpush1.msra.mxu0 0.0
        %562 = vmatprep.subr.mxu0 0.0
        %563 = vmatpush1.msra.mxu0 0.0
        %564 = vmatprep.subr.mxu0 0.0
        %565 = vmatpush1.msra.mxu0 0.0
        %566 = vmatprep.subr.mxu0 0.0
        %567 = vmatpush1.msra.mxu0 0.0
        %568 = vmatprep.subr.mxu0 0.0
        %569 = vmatpush1.msra.mxu0 0.0
        %570 = vmatprep.subr.mxu0 0.0
        %571 = vmatpush1.msra.mxu0 0.0
        %572 = vmatprep.subr.mxu0 0.0
        %573 = vmatpush1.msra.mxu0 0.0
        %574 = vmatprep.subr.mxu0 0.0
        %575 = vmatpush1.msra.mxu0 0.0
        %576 = vmatprep.subr.mxu0 0.0
        %577 = vmatpush1.msra.mxu0 0.0
        %578 = vmatprep.subr.mxu0 0.0
        %579 = vmatpush1.msra.mxu0 0.0
        %580 = vmatprep.subr.mxu0 0.0
        %581 = vmatpush1.msra.mxu0 0.0
        %582 = vmatprep.subr.mxu0 0.0
        %583 = vmatpush1.msra.mxu0 0.0
        %584 = vmatprep.subr.mxu0 0.0
        %585 = vmatpush1.msra.mxu0 0.0
        %586 = vmatprep.subr.mxu0 0.0
        %587 = vmatpush1.msra.mxu0 0.0
        %588 = vmatprep.subr.mxu0 0.0
        %589 = vmatpush1.msra.mxu0 0.0
        %590 = vmatprep.subr.mxu0 0.0
        %591 = vmatpush1.msra.mxu0 0.0
        %592 = vmatprep.subr.mxu0 0.0
        %593 = vmatpush1.msra.mxu0 0.0
        %594 = vmatprep.subr.mxu0 0.0
        %595 = vmatpush1.msra.mxu0 0.0
        %596 = vmatprep.subr.mxu0 0.0
        %597 = vmatpush1.msra.mxu0 0.0
        %598 = vmatprep.subr.mxu0 0.0
        %599 = vmatpush1.msra.mxu0 0.0
        %600 = vmatprep.subr.mxu0 0.0
        %601 = vmatpush1.msra.mxu0 0.0
        %602 = vmatprep.mubr.f32.mxu0 0.0
        %603 = vmatmul.mubr.f32.gmra.mrb[0].mxu0 %v536
        %v604 = vpop.f32.mrb[0].mxu0
        %v605 = vadd.f32 0.0, %v604
        %v606 = vpop.f32.mrb[0].mxu0
        %607 = vdwg.mxu0
        %vm608 = vcmask 130048
        %v610 = vsel %vm608, %v459, 0
        %v613 = vsel %vm608, %v532, 0
        %615 = vmatprep.subr.mxu0 0.0
        %616 = vmatpush1.xpose.msra.mxu0 %v613
        %617 = vmatprep.subr.mxu0 0.0
        %618 = vmatpush1.xpose.msra.mxu0 0.0
        %619 = vmatprep.subr.mxu0 0.0
        %620 = vmatpush1.xpose.msra.mxu0 0.0
        %621 = vmatprep.subr.mxu0 0.0
        %622 = vmatpush1.xpose.msra.mxu0 0.0
        %623 = vmatprep.subr.mxu0 0.0
        %624 = vmatpush1.xpose.msra.mxu0 0.0
        %625 = vmatprep.subr.mxu0 0.0
        %626 = vmatpush1.xpose.msra.mxu0 0.0
        %627 = vmatprep.subr.mxu0 0.0
        %628 = vmatpush1.xpose.msra.mxu0 0.0
        %629 = vmatprep.subr.mxu0 0.0
        %630 = vmatpush1.xpose.msra.mxu0 0.0
        %631 = vmatprep.subr.mxu0 0.0
        %632 = vmatpush1.xpose.msra.mxu0 0.0
        %633 = vmatprep.subr.mxu0 0.0
        %634 = vmatpush1.xpose.msra.mxu0 0.0
        %635 = vmatprep.subr.mxu0 0.0
        %636 = vmatpush1.xpose.msra.mxu0 0.0
        %637 = vmatprep.subr.mxu0 0.0
        %638 = vmatpush1.xpose.msra.mxu0 0.0
        %639 = vmatprep.subr.mxu0 0.0
        %640 = vmatpush1.xpose.msra.mxu0 0.0
        %641 = vmatprep.subr.mxu0 0.0
        %642 = vmatpush1.xpose.msra.mxu0 0.0
        %643 = vmatprep.subr.mxu0 0.0
        %644 = vmatpush1.xpose.msra.mxu0 0.0
        %645 = vmatprep.subr.mxu0 0.0
        %646 = vmatpush1.xpose.msra.mxu0 0.0
        %647 = vmatprep.subr.mxu0 0.0
        %648 = vmatpush1.xpose.msra.mxu0 0.0
        %649 = vmatprep.subr.mxu0 0.0
        %650 = vmatpush1.xpose.msra.mxu0 0.0
        %651 = vmatprep.subr.mxu0 0.0
        %652 = vmatpush1.xpose.msra.mxu0 0.0
        %653 = vmatprep.subr.mxu0 0.0
        %654 = vmatpush1.xpose.msra.mxu0 0.0
        %655 = vmatprep.subr.mxu0 0.0
        %656 = vmatpush1.xpose.msra.mxu0 0.0
        %657 = vmatprep.subr.mxu0 0.0
        %658 = vmatpush1.xpose.msra.mxu0 0.0
        %659 = vmatprep.subr.mxu0 0.0
        %660 = vmatpush1.xpose.msra.mxu0 0.0
        %661 = vmatprep.subr.mxu0 0.0
        %662 = vmatpush1.xpose.msra.mxu0 0.0
        %663 = vmatprep.subr.mxu0 0.0
        %664 = vmatpush1.xpose.msra.mxu0 0.0
        %665 = vmatprep.subr.mxu0 0.0
        %666 = vmatpush1.xpose.msra.mxu0 0.0
        %667 = vmatprep.subr.mxu0 0.0
        %668 = vmatpush1.xpose.msra.mxu0 0.0
        %669 = vmatprep.subr.mxu0 0.0
        %670 = vmatpush1.xpose.msra.mxu0 0.0
        %671 = vmatprep.subr.mxu0 0.0
        %672 = vmatpush1.xpose.msra.mxu0 0.0
        %673 = vmatprep.subr.mxu0 0.0
        %674 = vmatpush1.xpose.msra.mxu0 0.0
        %675 = vmatprep.subr.mxu0 0.0
        %676 = vmatpush1.xpose.msra.mxu0 0.0
        %677 = vmatprep.subr.mxu0 0.0
        %678 = vmatpush1.xpose.msra.mxu0 0.0
        %679 = vmatprep.mubr.f32.mxu0 0.0
        %680 = vmatmul.mubr.f32.gmra.mrb[0].mxu0 %v610
        %v681 = vpop.f32.mrb[0].mxu0
        %v682 = vadd.f32 0.0, %v681
        %v683 = vpop.f32.mrb[0].mxu0
        %684 = vdwg.mxu0
        %v685 = vmul.f32 %v682, 0.25
        %vm686 = vcmask 64512
        %v687 = vsel %vm686, %v685, -inf
        %688 = vmax.xlane.f32.xlu0 %v687
        %v689 = vpop.xlane.xlu0 %688
        %v690 = vsub.f32 %v685, %v689
        %v691 = vmul.f32 %v690, 1.442695
        %v692 = vpow.pop %v691
        %v693 = vsel %vm686, %v692, 0.0
        %694 = vadd.xlane.f32.xlu0 %v693
        %v695 = vpop.xlane.xlu0 %694
        %v696 = vrcp.pop %v695
        %v697 = vmul.f32 %v692, %v696
        %v699 = vsel %vm686, %v697, 0
        %701 = vmatprep.subr.mxu0 0.0
        %702 = vmatpush1.msra.mxu0 %v605
        %703 = vmatprep.subr.mxu0 0.0
        %704 = vmatpush1.msra.mxu0 0.0
        %705 = vmatprep.subr.mxu0 0.0
        %706 = vmatpush1.msra.mxu0 0.0
        %707 = vmatprep.subr.mxu0 0.0
        %708 = vmatpush1.msra.mxu0 0.0
        %709 = vmatprep.subr.mxu0 0.0
        %710 = vmatpush1.msra.mxu0 0.0
        %711 = vmatprep.subr.mxu0 0.0
        %712 = vmatpush1.msra.mxu0 0.0
        %713 = vmatprep.subr.mxu0 0.0
        %714 = vmatpush1.msra.mxu0 0.0
        %715 = vmatprep.subr.mxu0 0.0
        %716 = vmatpush1.msra.mxu0 0.0
        %717 = vmatprep.subr.mxu0 0.0
        %718 = vmatpush1.msra.mxu0 0.0
        %719 = vmatprep.subr.mxu0 0.0
        %720 = vmatpush1.msra.mxu0 0.0
        %721 = vmatprep.subr.mxu0 0.0
        %722 = vmatpush1.msra.mxu0 0.0
        %723 = vmatprep.subr.mxu0 0.0
        %724 = vmatpush1.msra.mxu0 0.0
        %725 = vmatprep.subr.mxu0 0.0
        %726 = vmatpush1.msra.mxu0 0.0
        %727 = vmatprep.subr.mxu0 0.0
        %728 = vmatpush1.msra.mxu0 0.0
        %729 = vmatprep.subr.mxu0 0.0
        %730 = vmatpush1.msra.mxu0 0.0
        %731 = vmatprep.subr.mxu0 0.0
        %732 = vmatpush1.msra.mxu0 0.0
        %733 = vmatprep.subr.mxu0 0.0
        %734 = vmatpush1.msra.mxu0 0.0
        %735 = vmatprep.subr.mxu0 0.0
        %736 = vmatpush1.msra.mxu0 0.0
        %737 = vmatprep.subr.mxu0 0.0
        %738 = vmatpush1.msra.mxu0 0.0
        %739 = vmatprep.subr.mxu0 0.0
        %740 = vmatpush1.msra.mxu0 0.0
        %741 = vmatprep.subr.mxu0 0.0
        %742 = vmatpush1.msra.mxu0 0.0
        %743 = vmatprep.subr.mxu0 0.0
        %744 = vmatpush1.msra.mxu0 0.0
        %745 = vmatprep.subr.mxu0 0.0
        %746 = vmatpush1.msra.mxu0 0.0
        %747 = vmatprep.subr.mxu0 0.0
        %748 = vmatpush1.msra.mxu0 0.0
        %749 = vmatprep.subr.mxu0 0.0
        %750 = vmatpush1.msra.mxu0 0.0
        %751 = vmatprep.subr.mxu0 0.0
        %752 = vmatpush1.msra.mxu0 0.0
        %753 = vmatprep.subr.mxu0 0.0
        %754 = vmatpush1.msra.mxu0 0.0
        %755 = vmatprep.subr.mxu0 0.0
        %756 = vmatpush1.msra.mxu0 0.0
        %757 = vmatprep.subr.mxu0 0.0
        %758 = vmatpush1.msra.mxu0 0.0
        %759 = vmatprep.subr.mxu0 0.0
        %760 = vmatpush1.msra.mxu0 0.0
        %761 = vmatprep.subr.mxu0 0.0
        %762 = vmatpush1.msra.mxu0 0.0
        %763 = vmatprep.subr.mxu0 0.0
        %764 = vmatpush1.msra.mxu0 0.0
        %765 = vmatprep.mubr.f32.mxu0 0.0
        %766 = vmatmul.mubr.f32.gmra.mrb[0].mxu0 %v699
        %v767 = vpop.f32.mrb[0].mxu0
        %v768 = vadd.f32 0.0, %v767
        %v769 = vpop.f32.mrb[0].mxu0
        %770 = vdwg.mxu0
        %771 = vrot.lane.b32.xlu0 %v459, 112
        %v772 = vpop.permute.xlu0 %771
        %773 = vrot.lane.b32.xlu0 %v532, 112
        %v774 = vpop.permute.xlu0 %773
        %v775 = vsel %vm608, %v772, 0
        %v777 = vsel %vm608, %v774, 0
        %779 = vmatprep.subr.mxu0 0.0
        %780 = vmatpush1.xpose.msra.mxu0 %v777
        %781 = vmatprep.subr.mxu0 0.0
        %782 = vmatpush1.xpose.msra.mxu0 0.0
        %783 = vmatprep.subr.mxu0 0.0
        %784 = vmatpush1.xpose.msra.mxu0 0.0
        %785 = vmatprep.subr.mxu0 0.0
        %786 = vmatpush1.xpose.msra.mxu0 0.0
        %787 = vmatprep.subr.mxu0 0.0
        %788 = vmatpush1.xpose.msra.mxu0 0.0
        %789 = vmatprep.subr.mxu0 0.0
        %790 = vmatpush1.xpose.msra.mxu0 0.0
        %791 = vmatprep.subr.mxu0 0.0
        %792 = vmatpush1.xpose.msra.mxu0 0.0
        %793 = vmatprep.subr.mxu0 0.0
        %794 = vmatpush1.xpose.msra.mxu0 0.0
        %795 = vmatprep.subr.mxu0 0.0
        %796 = vmatpush1.xpose.msra.mxu0 0.0
        %797 = vmatprep.subr.mxu0 0.0
        %798 = vmatpush1.xpose.msra.mxu0 0.0
        %799 = vmatprep.subr.mxu0 0.0
        %800 = vmatpush1.xpose.msra.mxu0 0.0
        %801 = vmatprep.subr.mxu0 0.0
        %802 = vmatpush1.xpose.msra.mxu0 0.0
        %803 = vmatprep.subr.mxu0 0.0
        %804 = vmatpush1.xpose.msra.mxu0 0.0
        %805 = vmatprep.subr.mxu0 0.0
        %806 = vmatpush1.xpose.msra.mxu0 0.0
        %807 = vmatprep.subr.mxu0 0.0
        %808 = vmatpush1.xpose.msra.mxu0 0.0
        %809 = vmatprep.subr.mxu0 0.0
        %810 = vmatpush1.xpose.msra.mxu0 0.0
        %811 = vmatprep.subr.mxu0 0.0
        %812 = vmatpush1.xpose.msra.mxu0 0.0
        %813 = vmatprep.subr.mxu0 0.0
        %814 = vmatpush1.xpose.msra.mxu0 0.0
        %815 = vmatprep.subr.mxu0 0.0
        %816 = vmatpush1.xpose.msra.mxu0 0.0
        %817 = vmatprep.subr.mxu0 0.0
        %818 = vmatpush1.xpose.msra.mxu0 0.0
        %819 = vmatprep.subr.mxu0 0.0
        %820 = vmatpush1.xpose.msra.mxu0 0.0
        %821 = vmatprep.subr.mxu0 0.0
        %822 = vmatpush1.xpose.msra.mxu0 0.0
        %823 = vmatprep.subr.mxu0 0.0
        %824 = vmatpush1.xpose.msra.mxu0 0.0
        %825 = vmatprep.subr.mxu0 0.0
        %826 = vmatpush1.xpose.msra.mxu0 0.0
        %827 = vmatprep.subr.mxu0 0.0
        %828 = vmatpush1.xpose.msra.mxu0 0.0
        %829 = vmatprep.subr.mxu0 0.0
        %830 = vmatpush1.xpose.msra.mxu0 0.0
        %831 = vmatprep.subr.mxu0 0.0
        %832 = vmatpush1.xpose.msra.mxu0 0.0
        %833 = vmatprep.subr.mxu0 0.0
        %834 = vmatpush1.xpose.msra.mxu0 0.0
        %835 = vmatprep.subr.mxu0 0.0
        %836 = vmatpush1.xpose.msra.mxu0 0.0
        %837 = vmatprep.subr.mxu0 0.0
        %838 = vmatpush1.xpose.msra.mxu0 0.0
        %839 = vmatprep.subr.mxu0 0.0
        %840 = vmatpush1.xpose.msra.mxu0 0.0
        %841 = vmatprep.subr.mxu0 0.0
        %842 = vmatpush1.xpose.msra.mxu0 0.0
        %843 = vmatprep.mubr.f32.mxu0 0.0
        %844 = vmatmul.mubr.f32.gmra.mrb[0].mxu0 %v775
        %v845 = vpop.f32.mrb[0].mxu0
        %v846 = vadd.f32 0.0, %v845
        %v847 = vpop.f32.mrb[0].mxu0
        %848 = vdwg.mxu0
        %v849 = vmul.f32 %v846, 0.25
        %v850 = vsel %vm686, %v849, -inf
        %851 = vmax.xlane.f32.xlu0 %v850
        %v852 = vpop.xlane.xlu0 %851
        %v853 = vsub.f32 %v849, %v852
        %v854 = vmul.f32 %v853, 1.442695
        %v855 = vpow.pop %v854
        %v856 = vsel %vm686, %v855, 0.0
        %857 = vadd.xlane.f32.xlu0 %v856
        %v858 = vpop.xlane.xlu0 %857
        %v859 = vrcp.pop %v858
        %v860 = vmul.f32 %v855, %v859
        %862 = vrot.lane.b32.xlu0 %v605, 112
        %v863 = vpop.permute.xlu0 %862
        %v866 = vsel %vm686, %v860, 0
        %868 = vmatprep.subr.mxu0 0.0
        %869 = vmatpush1.msra.mxu0 %v863
        %870 = vmatprep.subr.mxu0 0.0
        %871 = vmatpush1.msra.mxu0 0.0
        %872 = vmatprep.subr.mxu0 0.0
        %873 = vmatpush1.msra.mxu0 0.0
        %874 = vmatprep.subr.mxu0 0.0
        %875 = vmatpush1.msra.mxu0 0.0
        %876 = vmatprep.subr.mxu0 0.0
        %877 = vmatpush1.msra.mxu0 0.0
        %878 = vmatprep.subr.mxu0 0.0
        %879 = vmatpush1.msra.mxu0 0.0
        %880 = vmatprep.subr.mxu0 0.0
        %881 = vmatpush1.msra.mxu0 0.0
        %882 = vmatprep.subr.mxu0 0.0
        %883 = vmatpush1.msra.mxu0 0.0
        %884 = vmatprep.subr.mxu0 0.0
        %885 = vmatpush1.msra.mxu0 0.0
        %886 = vmatprep.subr.mxu0 0.0
        %887 = vmatpush1.msra.mxu0 0.0
        %888 = vmatprep.subr.mxu0 0.0
        %889 = vmatpush1.msra.mxu0 0.0
        %890 = vmatprep.subr.mxu0 0.0
        %891 = vmatpush1.msra.mxu0 0.0
        %892 = vmatprep.subr.mxu0 0.0
        %893 = vmatpush1.msra.mxu0 0.0
        %894 = vmatprep.subr.mxu0 0.0
        %895 = vmatpush1.msra.mxu0 0.0
        %896 = vmatprep.subr.mxu0 0.0
        %897 = vmatpush1.msra.mxu0 0.0
        %898 = vmatprep.subr.mxu0 0.0
        %899 = vmatpush1.msra.mxu0 0.0
        %900 = vmatprep.subr.mxu0 0.0
        %901 = vmatpush1.msra.mxu0 0.0
        %902 = vmatprep.subr.mxu0 0.0
        %903 = vmatpush1.msra.mxu0 0.0
        %904 = vmatprep.subr.mxu0 0.0
        %905 = vmatpush1.msra.mxu0 0.0
        %906 = vmatprep.subr.mxu0 0.0
        %907 = vmatpush1.msra.mxu0 0.0
        %908 = vmatprep.subr.mxu0 0.0
        %909 = vmatpush1.msra.mxu0 0.0
        %910 = vmatprep.subr.mxu0 0.0
        %911 = vmatpush1.msra.mxu0 0.0
        %912 = vmatprep.subr.mxu0 0.0
        %913 = vmatpush1.msra.mxu0 0.0
        %914 = vmatprep.subr.mxu0 0.0
        %915 = vmatpush1.msra.mxu0 0.0
        %916 = vmatprep.subr.mxu0 0.0
        %917 = vmatpush1.msra.mxu0 0.0
        %918 = vmatprep.subr.mxu0 0.0
        %919 = vmatpush1.msra.mxu0 0.0
        %920 = vmatprep.subr.mxu0 0.0
        %921 = vmatpush1.msra.mxu0 0.0
        %922 = vmatprep.subr.mxu0 0.0
        %923 = vmatpush1.msra.mxu0 0.0
        %924 = vmatprep.subr.mxu0 0.0
        %925 = vmatpush1.msra.mxu0 0.0
        %926 = vmatprep.subr.mxu0 0.0
        %927 = vmatpush1.msra.mxu0 0.0
        %928 = vmatprep.subr.mxu0 0.0
        %929 = vmatpush1.msra.mxu0 0.0
        %930 = vmatprep.subr.mxu0 0.0
        %931 = vmatpush1.msra.mxu0 0.0
        %932 = vmatprep.mubr.f32.mxu0 0.0
        %933 = vmatmul.mubr.f32.gmra.mrb[0].mxu0 %v866
        %v934 = vpop.f32.mrb[0].mxu0
        %v935 = vadd.f32 0.0, %v934
        %v936 = vpop.f32.mrb[0].mxu0
        %937 = vdwg.mxu0
        %938 = vrot.lane.b32.xlu0 %v459, 96
        %v939 = vpop.permute.xlu0 %938
        %940 = vrot.lane.b32.xlu0 %v532, 96
        %v941 = vpop.permute.xlu0 %940
        %v942 = vsel %vm608, %v939, 0
        %v944 = vsel %vm608, %v941, 0
        %946 = vmatprep.subr.mxu0 0.0
        %947 = vmatpush1.xpose.msra.mxu0 %v944
        %948 = vmatprep.subr.mxu0 0.0
        %949 = vmatpush1.xpose.msra.mxu0 0.0
        %950 = vmatprep.subr.mxu0 0.0
        %951 = vmatpush1.xpose.msra.mxu0 0.0
        %952 = vmatprep.subr.mxu0 0.0
        %953 = vmatpush1.xpose.msra.mxu0 0.0
        %954 = vmatprep.subr.mxu0 0.0
        %955 = vmatpush1.xpose.msra.mxu0 0.0
        %956 = vmatprep.subr.mxu0 0.0
        %957 = vmatpush1.xpose.msra.mxu0 0.0
        %958 = vmatprep.subr.mxu0 0.0
        %959 = vmatpush1.xpose.msra.mxu0 0.0
        %960 = vmatprep.subr.mxu0 0.0
        %961 = vmatpush1.xpose.msra.mxu0 0.0
        %962 = vmatprep.subr.mxu0 0.0
        %963 = vmatpush1.xpose.msra.mxu0 0.0
        %964 = vmatprep.subr.mxu0 0.0
        %965 = vmatpush1.xpose.msra.mxu0 0.0
        %966 = vmatprep.subr.mxu0 0.0
        %967 = vmatpush1.xpose.msra.mxu0 0.0
        %968 = vmatprep.subr.mxu0 0.0
        %969 = vmatpush1.xpose.msra.mxu0 0.0
        %970 = vmatprep.subr.mxu0 0.0
        %971 = vmatpush1.xpose.msra.mxu0 0.0
        %972 = vmatprep.subr.mxu0 0.0
        %973 = vmatpush1.xpose.msra.mxu0 0.0
        %974 = vmatprep.subr.mxu0 0.0
        %975 = vmatpush1.xpose.msra.mxu0 0.0
        %976 = vmatprep.subr.mxu0 0.0
        %977 = vmatpush1.xpose.msra.mxu0 0.0
        %978 = vmatprep.subr.mxu0 0.0
        %979 = vmatpush1.xpose.msra.mxu0 0.0
        %980 = vmatprep.subr.mxu0 0.0
        %981 = vmatpush1.xpose.msra.mxu0 0.0
        %982 = vmatprep.subr.mxu0 0.0
        %983 = vmatpush1.xpose.msra.mxu0 0.0
        %984 = vmatprep.subr.mxu0 0.0
        %985 = vmatpush1.xpose.msra.mxu0 0.0
        %986 = vmatprep.subr.mxu0 0.0
        %987 = vmatpush1.xpose.msra.mxu0 0.0
        %988 = vmatprep.subr.mxu0 0.0
        %989 = vmatpush1.xpose.msra.mxu0 0.0
        %990 = vmatprep.subr.mxu0 0.0
        %991 = vmatpush1.xpose.msra.mxu0 0.0
        %992 = vmatprep.subr.mxu0 0.0
        %993 = vmatpush1.xpose.msra.mxu0 0.0
        %994 = vmatprep.subr.mxu0 0.0
        %995 = vmatpush1.xpose.msra.mxu0 0.0
        %996 = vmatprep.subr.mxu0 0.0
        %997 = vmatpush1.xpose.msra.mxu0 0.0
        %998 = vmatprep.subr.mxu0 0.0
        %999 = vmatpush1.xpose.msra.mxu0 0.0
        %1000 = vmatprep.subr.mxu0 0.0
        %1001 = vmatpush1.xpose.msra.mxu0 0.0
        %1002 = vmatprep.subr.mxu0 0.0
        %1003 = vmatpush1.xpose.msra.mxu0 0.0
        %1004 = vmatprep.subr.mxu0 0.0
        %1005 = vmatpush1.xpose.msra.mxu0 0.0
        %1006 = vmatprep.subr.mxu0 0.0
        %1007 = vmatpush1.xpose.msra.mxu0 0.0
        %1008 = vmatprep.subr.mxu0 0.0
        %1009 = vmatpush1.xpose.msra.mxu0 0.0
        %1010 = vmatprep.mubr.f32.mxu0 0.0
        %1011 = vmatmul.mubr.f32.gmra.mrb[0].mxu0 %v942
        %v1012 = vpop.f32.mrb[0].mxu0
        %v1013 = vadd.f32 0.0, %v1012
        %v1014 = vpop.f32.mrb[0].mxu0
        %1015 = vdwg.mxu0
        %v1016 = vmul.f32 %v1013, 0.25
        %v1017 = vsel %vm686, %v1016, -inf
        %1018 = vmax.xlane.f32.xlu0 %v1017
        %v1019 = vpop.xlane.xlu0 %1018
        %v1020 = vsub.f32 %v1016, %v1019
        %v1021 = vmul.f32 %v1020, 1.442695
        %v1022 = vpow.pop %v1021
        %v1023 = vsel %vm686, %v1022, 0.0
        %1024 = vadd.xlane.f32.xlu0 %v1023
        %v1025 = vpop.xlane.xlu0 %1024
        %v1026 = vrcp.pop %v1025
        %v1027 = vmul.f32 %v1022, %v1026
        %1028 = vrot.lane.b32.xlu0 %v605, 96
        %v1029 = vpop.permute.xlu0 %1028
        %v1032 = vsel %vm686, %v1027, 0
        %1034 = vmatprep.subr.mxu0 0.0
        %1035 = vmatpush1.msra.mxu0 %v1029
        %1036 = vmatprep.subr.mxu0 0.0
        %1037 = vmatpush1.msra.mxu0 0.0
        %1038 = vmatprep.subr.mxu0 0.0
        %1039 = vmatpush1.msra.mxu0 0.0
        %1040 = vmatprep.subr.mxu0 0.0
        %1041 = vmatpush1.msra.mxu0 0.0
        %1042 = vmatprep.subr.mxu0 0.0
        %1043 = vmatpush1.msra.mxu0 0.0
        %1044 = vmatprep.subr.mxu0 0.0
        %1045 = vmatpush1.msra.mxu0 0.0
        %1046 = vmatprep.subr.mxu0 0.0
        %1047 = vmatpush1.msra.mxu0 0.0
        %1048 = vmatprep.subr.mxu0 0.0
        %1049 = vmatpush1.msra.mxu0 0.0
        %1050 = vmatprep.subr.mxu0 0.0
        %1051 = vmatpush1.msra.mxu0 0.0
        %1052 = vmatprep.subr.mxu0 0.0
        %1053 = vmatpush1.msra.mxu0 0.0
        %1054 = vmatprep.subr.mxu0 0.0
        %1055 = vmatpush1.msra.mxu0 0.0
        %1056 = vmatprep.subr.mxu0 0.0
        %1057 = vmatpush1.msra.mxu0 0.0
        %1058 = vmatprep.subr.mxu0 0.0
        %1059 = vmatpush1.msra.mxu0 0.0
        %1060 = vmatprep.subr.mxu0 0.0
        %1061 = vmatpush1.msra.mxu0 0.0
        %1062 = vmatprep.subr.mxu0 0.0
        %1063 = vmatpush1.msra.mxu0 0.0
        %1064 = vmatprep.subr.mxu0 0.0
        %1065 = vmatpush1.msra.mxu0 0.0
        %1066 = vmatprep.subr.mxu0 0.0
        %1067 = vmatpush1.msra.mxu0 0.0
        %1068 = vmatprep.subr.mxu0 0.0
        %1069 = vmatpush1.msra.mxu0 0.0
        %1070 = vmatprep.subr.mxu0 0.0
        %1071 = vmatpush1.msra.mxu0 0.0
        %1072 = vmatprep.subr.mxu0 0.0
        %1073 = vmatpush1.msra.mxu0 0.0
        %1074 = vmatprep.subr.mxu0 0.0
        %1075 = vmatpush1.msra.mxu0 0.0
        %1076 = vmatprep.subr.mxu0 0.0
        %1077 = vmatpush1.msra.mxu0 0.0
        %1078 = vmatprep.subr.mxu0 0.0
        %1079 = vmatpush1.msra.mxu0 0.0
        %1080 = vmatprep.subr.mxu0 0.0
        %1081 = vmatpush1.msra.mxu0 0.0
        %1082 = vmatprep.subr.mxu0 0.0
        %1083 = vmatpush1.msra.mxu0 0.0
        %1084 = vmatprep.subr.mxu0 0.0
        %1085 = vmatpush1.msra.mxu0 0.0
        %1086 = vmatprep.subr.mxu0 0.0
        %1087 = vmatpush1.msra.mxu0 0.0
        %1088 = vmatprep.subr.mxu0 0.0
        %1089 = vmatpush1.msra.mxu0 0.0
        %1090 = vmatprep.subr.mxu0 0.0
        %1091 = vmatpush1.msra.mxu0 0.0
        %1092 = vmatprep.subr.mxu0 0.0
        %1093 = vmatpush1.msra.mxu0 0.0
        %1094 = vmatprep.subr.mxu0 0.0
        %1095 = vmatpush1.msra.mxu0 0.0
        %1096 = vmatprep.subr.mxu0 0.0
        %1097 = vmatpush1.msra.mxu0 0.0
        %1098 = vmatprep.mubr.f32.mxu0 0.0
        %1099 = vmatmul.mubr.f32.gmra.mrb[0].mxu0 %v1032
        %v1100 = vpop.f32.mrb[0].mxu0
        %v1101 = vadd.f32 0.0, %v1100
        %v1102 = vpop.f32.mrb[0].mxu0
        %1103 = vdwg.mxu0
        %1104 = vrot.lane.b32.xlu0 %v459, 80
        %v1105 = vpop.permute.xlu0 %1104
        %1106 = vrot.lane.b32.xlu0 %v532, 80
        %v1107 = vpop.permute.xlu0 %1106
        %v1108 = vsel %vm608, %v1105, 0
        %v1110 = vsel %vm608, %v1107, 0
        %1112 = vmatprep.subr.mxu0 0.0
        %1113 = vmatpush1.xpose.msra.mxu0 %v1110
        %1114 = vmatprep.subr.mxu0 0.0
        %1115 = vmatpush1.xpose.msra.mxu0 0.0
        %1116 = vmatprep.subr.mxu0 0.0
        %1117 = vmatpush1.xpose.msra.mxu0 0.0
        %1118 = vmatprep.subr.mxu0 0.0
        %1119 = vmatpush1.xpose.msra.mxu0 0.0
        %1120 = vmatprep.subr.mxu0 0.0
        %1121 = vmatpush1.xpose.msra.mxu0 0.0
        %1122 = vmatprep.subr.mxu0 0.0
        %1123 = vmatpush1.xpose.msra.mxu0 0.0
        %1124 = vmatprep.subr.mxu0 0.0
        %1125 = vmatpush1.xpose.msra.mxu0 0.0
        %1126 = vmatprep.subr.mxu0 0.0
        %1127 = vmatpush1.xpose.msra.mxu0 0.0
        %1128 = vmatprep.subr.mxu0 0.0
        %1129 = vmatpush1.xpose.msra.mxu0 0.0
        %1130 = vmatprep.subr.mxu0 0.0
        %1131 = vmatpush1.xpose.msra.mxu0 0.0
        %1132 = vmatprep.subr.mxu0 0.0
        %1133 = vmatpush1.xpose.msra.mxu0 0.0
        %1134 = vmatprep.subr.mxu0 0.0
        %1135 = vmatpush1.xpose.msra.mxu0 0.0
        %1136 = vmatprep.subr.mxu0 0.0
        %1137 = vmatpush1.xpose.msra.mxu0 0.0
        %1138 = vmatprep.subr.mxu0 0.0
        %1139 = vmatpush1.xpose.msra.mxu0 0.0
        %1140 = vmatprep.subr.mxu0 0.0
        %1141 = vmatpush1.xpose.msra.mxu0 0.0
        %1142 = vmatprep.subr.mxu0 0.0
        %1143 = vmatpush1.xpose.msra.mxu0 0.0
        %1144 = vmatprep.subr.mxu0 0.0
        %1145 = vmatpush1.xpose.msra.mxu0 0.0
        %1146 = vmatprep.subr.mxu0 0.0
        %1147 = vmatpush1.xpose.msra.mxu0 0.0
        %1148 = vmatprep.subr.mxu0 0.0
        %1149 = vmatpush1.xpose.msra.mxu0 0.0
        %1150 = vmatprep.subr.mxu0 0.0
        %1151 = vmatpush1.xpose.msra.mxu0 0.0
        %1152 = vmatprep.subr.mxu0 0.0
        %1153 = vmatpush1.xpose.msra.mxu0 0.0
        %1154 = vmatprep.subr.mxu0 0.0
        %1155 = vmatpush1.xpose.msra.mxu0 0.0
        %1156 = vmatprep.subr.mxu0 0.0
        %1157 = vmatpush1.xpose.msra.mxu0 0.0
        %1158 = vmatprep.subr.mxu0 0.0
        %1159 = vmatpush1.xpose.msra.mxu0 0.0
        %1160 = vmatprep.subr.mxu0 0.0
        %1161 = vmatpush1.xpose.msra.mxu0 0.0
        %1162 = vmatprep.subr.mxu0 0.0
        %1163 = vmatpush1.xpose.msra.mxu0 0.0
        %1164 = vmatprep.subr.mxu0 0.0
        %1165 = vmatpush1.xpose.msra.mxu0 0.0
        %1166 = vmatprep.subr.mxu0 0.0
        %1167 = vmatpush1.xpose.msra.mxu0 0.0
        %1168 = vmatprep.subr.mxu0 0.0
        %1169 = vmatpush1.xpose.msra.mxu0 0.0
        %1170 = vmatprep.subr.mxu0 0.0
        %1171 = vmatpush1.xpose.msra.mxu0 0.0
        %1172 = vmatprep.subr.mxu0 0.0
        %1173 = vmatpush1.xpose.msra.mxu0 0.0
        %1174 = vmatprep.subr.mxu0 0.0
        %1175 = vmatpush1.xpose.msra.mxu0 0.0
        %1176 = vmatprep.mubr.f32.mxu0 0.0
        %1177 = vmatmul.mubr.f32.gmra.mrb[0].mxu0 %v1108
        %v1178 = vpop.f32.mrb[0].mxu0
        %v1179 = vadd.f32 0.0, %v1178
        %v1180 = vpop.f32.mrb[0].mxu0
        %1181 = vdwg.mxu0
        %v1182 = vmul.f32 %v1179, 0.25
        %v1183 = vsel %vm686, %v1182, -inf
        %1184 = vmax.xlane.f32.xlu0 %v1183
        %v1185 = vpop.xlane.xlu0 %1184
        %v1186 = vsub.f32 %v1182, %v1185
        %v1187 = vmul.f32 %v1186, 1.442695
        %v1188 = vpow.pop %v1187
        %v1189 = vsel %vm686, %v1188, 0.0
        %1190 = vadd.xlane.f32.xlu0 %v1189
        %v1191 = vpop.xlane.xlu0 %1190
        %v1192 = vrcp.pop %v1191
        %v1193 = vmul.f32 %v1188, %v1192
        %1194 = vrot.lane.b32.xlu0 %v605, 80
        %v1195 = vpop.permute.xlu0 %1194
        %v1198 = vsel %vm686, %v1193, 0
        %1200 = vmatprep.subr.mxu0 0.0
        %1201 = vmatpush1.msra.mxu0 %v1195
        %1202 = vmatprep.subr.mxu0 0.0
        %1203 = vmatpush1.msra.mxu0 0.0
        %1204 = vmatprep.subr.mxu0 0.0
        %1205 = vmatpush1.msra.mxu0 0.0
        %1206 = vmatprep.subr.mxu0 0.0
        %1207 = vmatpush1.msra.mxu0 0.0
        %1208 = vmatprep.subr.mxu0 0.0
        %1209 = vmatpush1.msra.mxu0 0.0
        %1210 = vmatprep.subr.mxu0 0.0
        %1211 = vmatpush1.msra.mxu0 0.0
        %1212 = vmatprep.subr.mxu0 0.0
        %1213 = vmatpush1.msra.mxu0 0.0
        %1214 = vmatprep.subr.mxu0 0.0
        %1215 = vmatpush1.msra.mxu0 0.0
        %1216 = vmatprep.subr.mxu0 0.0
        %1217 = vmatpush1.msra.mxu0 0.0
        %1218 = vmatprep.subr.mxu0 0.0
        %1219 = vmatpush1.msra.mxu0 0.0
        %1220 = vmatprep.subr.mxu0 0.0
        %1221 = vmatpush1.msra.mxu0 0.0
        %1222 = vmatprep.subr.mxu0 0.0
        %1223 = vmatpush1.msra.mxu0 0.0
        %1224 = vmatprep.subr.mxu0 0.0
        %1225 = vmatpush1.msra.mxu0 0.0
        %1226 = vmatprep.subr.mxu0 0.0
        %1227 = vmatpush1.msra.mxu0 0.0
        %1228 = vmatprep.subr.mxu0 0.0
        %1229 = vmatpush1.msra.mxu0 0.0
        %1230 = vmatprep.subr.mxu0 0.0
        %1231 = vmatpush1.msra.mxu0 0.0
        %1232 = vmatprep.subr.mxu0 0.0
        %1233 = vmatpush1.msra.mxu0 0.0
        %1234 = vmatprep.subr.mxu0 0.0
        %1235 = vmatpush1.msra.mxu0 0.0
        %1236 = vmatprep.subr.mxu0 0.0
        %1237 = vmatpush1.msra.mxu0 0.0
        %1238 = vmatprep.subr.mxu0 0.0
        %1239 = vmatpush1.msra.mxu0 0.0
        %1240 = vmatprep.subr.mxu0 0.0
        %1241 = vmatpush1.msra.mxu0 0.0
        %1242 = vmatprep.subr.mxu0 0.0
        %1243 = vmatpush1.msra.mxu0 0.0
        %1244 = vmatprep.subr.mxu0 0.0
        %1245 = vmatpush1.msra.mxu0 0.0
        %1246 = vmatprep.subr.mxu0 0.0
        %1247 = vmatpush1.msra.mxu0 0.0
        %1248 = vmatprep.subr.mxu0 0.0
        %1249 = vmatpush1.msra.mxu0 0.0
        %1250 = vmatprep.subr.mxu0 0.0
        %1251 = vmatpush1.msra.mxu0 0.0
        %1252 = vmatprep.subr.mxu0 0.0
        %1253 = vmatpush1.msra.mxu0 0.0
        %1254 = vmatprep.subr.mxu0 0.0
        %1255 = vmatpush1.msra.mxu0 0.0
        %1256 = vmatprep.subr.mxu0 0.0
        %1257 = vmatpush1.msra.mxu0 0.0
        %1258 = vmatprep.subr.mxu0 0.0
        %1259 = vmatpush1.msra.mxu0 0.0
        %1260 = vmatprep.subr.mxu0 0.0
        %1261 = vmatpush1.msra.mxu0 0.0
        %1262 = vmatprep.subr.mxu0 0.0
        %1263 = vmatpush1.msra.mxu0 0.0
        %1264 = vmatprep.mubr.f32.mxu0 0.0
        %1265 = vmatmul.mubr.f32.gmra.mrb[0].mxu0 %v1198
        %v1266 = vpop.f32.mrb[0].mxu0
        %v1267 = vadd.f32 0.0, %v1266
        %v1268 = vpop.f32.mrb[0].mxu0
        %1269 = vdwg.mxu0
        %1271 = vrot.lane.b32.xlu0 %v935, 16
        %v1272 = vpop.permute.xlu0 %1271
        %1275 = vrot.lane.b32.xlu0 %v1101, 32
        %v1276 = vpop.permute.xlu0 %1275
        %1279 = vrot.lane.b32.xlu0 %v1267, 48
        %v1280 = vpop.permute.xlu0 %1279
        %v1282 = vsel %vm608, %v768, %v1272
        %v1283 = vsel %vm388, %v1282, %v1276
        %vm1284 = vcmask 392192
        %v1285 = vsel %vm1284, %v1283, %v1280
        %vm1286 = vcmask 523264
        %v1288 = vsel %vm1286, %v1285, 0
        %1290 = vmatprep.subr.mxu0 0.0
        %1291 = vmatpush1.msra.mxu0 %v380
        %1292 = vmatprep.subr.mxu0 0.0
        %1293 = vmatpush1.msra.mxu0 %v381
        %1294 = vmatprep.subr.mxu0 0.0
        %1295 = vmatpush1.msra.mxu0 %v382
        %1296 = vmatprep.subr.mxu0 0.0
        %1297 = vmatpush1.msra.mxu0 %v383
        %1298 = vmatprep.subr.mxu0 0.0
        %1299 = vmatpush1.msra.mxu0 %v384
        %1300 = vmatprep.subr.mxu0 0.0
        %1301 = vmatpush1.msra.mxu0 %v385
        %1302 = vmatprep.subr.mxu0 0.0
        %1303 = vmatpush1.msra.mxu0 %v386
        %1304 = vmatprep.subr.mxu0 0.0
        %1305 = vmatpush1.msra.mxu0 %v387
        %1306 = vmatprep.subr.mxu0 0.0
        %1307 = vmatpush1.msra.mxu0 0.0
        %1308 = vmatprep.subr.mxu0 0.0
        %1309 = vmatpush1.msra.mxu0 0.0
        %1310 = vmatprep.subr.mxu0 0.0
        %1311 = vmatpush1.msra.mxu0 0.0
        %1312 = vmatprep.subr.mxu0 0.0
        %1313 = vmatpush1.msra.mxu0 0.0
        %1314 = vmatprep.subr.mxu0 0.0
        %1315 = vmatpush1.msra.mxu0 0.0
        %1316 = vmatprep.subr.mxu0 0.0
        %1317 = vmatpush1.msra.mxu0 0.0
        %1318 = vmatprep.subr.mxu0 0.0
        %1319 = vmatpush1.msra.mxu0 0.0
        %1320 = vmatprep.subr.mxu0 0.0
        %1321 = vmatpush1.msra.mxu0 0.0
        %1322 = vmatprep.subr.mxu0 0.0
        %1323 = vmatpush1.msra.mxu0 0.0
        %1324 = vmatprep.subr.mxu0 0.0
        %1325 = vmatpush1.msra.mxu0 0.0
        %1326 = vmatprep.subr.mxu0 0.0
        %1327 = vmatpush1.msra.mxu0 0.0
        %1328 = vmatprep.subr.mxu0 0.0
        %1329 = vmatpush1.msra.mxu0 0.0
        %1330 = vmatprep.subr.mxu0 0.0
        %1331 = vmatpush1.msra.mxu0 0.0
        %1332 = vmatprep.subr.mxu0 0.0
        %1333 = vmatpush1.msra.mxu0 0.0
        %1334 = vmatprep.subr.mxu0 0.0
        %1335 = vmatpush1.msra.mxu0 0.0
        %1336 = vmatprep.subr.mxu0 0.0
        %1337 = vmatpush1.msra.mxu0 0.0
        %1338 = vmatprep.subr.mxu0 0.0
        %1339 = vmatpush1.msra.mxu0 0.0
        %1340 = vmatprep.subr.mxu0 0.0
        %1341 = vmatpush1.msra.mxu0 0.0
        %1342 = vmatprep.subr.mxu0 0.0
        %1343 = vmatpush1.msra.mxu0 0.0
        %1344 = vmatprep.subr.mxu0 0.0
        %1345 = vmatpush1.msra.mxu0 0.0
        %1346 = vmatprep.subr.mxu0 0.0
        %1347 = vmatpush1.msra.mxu0 0.0
        %1348 = vmatprep.subr.mxu0 0.0
        %1349 = vmatpush1.msra.mxu0 0.0
        %1350 = vmatprep.subr.mxu0 0.0
        %1351 = vmatpush1.msra.mxu0 0.0
        %1352 = vmatprep.subr.mxu0 0.0
        %1353 = vmatpush1.msra.mxu0 0.0
        %1354 = vmatprep.mubr.f32.mxu0 0.0
        %1355 = vmatmul.mubr.f32.gmra.mrb[0].mxu0 %v1288
        %v1356 = vpop.f32.mrb[0].mxu0
        %v1357 = vadd.f32 0.0, %v1356
        %v1358 = vpop.f32.mrb[0].mxu0
        %1359 = vdwg.mxu0
        %1360 = vst.msk [vmem:[%s364] sm:$0xff] %vm388, %v1357
        %s1361 = sand.u32 %s197, 1
        %s1362 = scalar_lea.sflag [#allocation4], %s1361
        %s1363 = sand.u32 %s197, 1
        %s1364 = smul.addr %s1363, 8
        %s1365 = scalar_lea.vmem [#allocation8], %s1364
        // Predicated region
        $region61: #{tpu_custom_call.1} parent=47 // pred_check
          %p1366 = pneg %p207
        $region62: #{tpu_custom_call.1} parent=47 // pred_check_branch
          %1368 = sbr.rel (%p1366) target = $region64
        $region63: #{tpu_custom_call.1} parent=47 // pred_region
          %s1370 = ssub.s32 128, 128
          %1371 = vsyncadd %s1362, %s1370
          %s1372 = smul.addr %s27, 128
          %s1373 = scalar_lea.hbm %s7, %s1372
          %s1375 = sshll.u32 %s1365, 4
          %s1376 = int_to_ptr.vmem [resolvable:$true] %s1375
          %1378 = dma.vmem_to_hbm [thread:$0]  %s1376, 128, %s1373, %s1362
        $region64: #{tpu_custom_call.1} parent=47 // pred_fallthru
          _
      $region48: #{tpu_custom_call.1} parent=5 // pred_fallthru
        _
      %p1379 = scmp.le.s32.totalorder 2, %s22
      // Predicated region
      $region65: #{tpu_custom_call.1} parent=5 // pred_check
        %p1380 = pneg %p1379
      $region66: #{tpu_custom_call.1} parent=5 // pred_check_branch
        %1382 = sbr.rel (%p1380) target = $region68
      $region67: #{tpu_custom_call.1} parent=5 // pred_region
        %s1383 = ssub.s32 %s22, 2
        // Predicated region
        $region69: #{tpu_custom_call.1} parent=67 // pred_check
          %p1384 = pneg %p213
        $region70: #{tpu_custom_call.1} parent=67 // pred_check_branch
          %1386 = sbr.rel (%p1384) target = $region72
        $region71: #{tpu_custom_call.1} parent=67 // pred_region
          %s1387 = sand.u32 %s198, 1
          %s1388 = scalar_lea.sflag [#allocation4], %s1387
          %s1389 = sand.u32 %s198, 1
          %s1390 = smul.addr %s1389, 8
          %s1391 = scalar_lea.vmem [#allocation8], %s1390
          %1392 = dma.done %s1388, 128
        $region72: #{tpu_custom_call.1} parent=67 // pred_fallthru
          _
      $region68: #{tpu_custom_call.1} parent=5 // pred_fallthru
        _
    $region6: #{tpu_custom_call.1} parent=1 // loop_footer
      %s26 = sadd.s32 1, %s22
    $region7: #{tpu_custom_call.1} parent=1 // loop_footer_branch
      %21 = sbr.rel target = $region3
    $region8: #{tpu_custom_call.1} parent=1 // loop_exit
      _
    %1393 = vsyncpa [#allocation3], 1
    %s1394 = scalar_lea.sflag [#allocation3], 1
    %1395 = vsyncpa %s1394, 1
    %1396 = vsyncpa [#allocation6], 1
    %s1397 = scalar_lea.sflag [#allocation6], 1
    %1398 = vsyncpa %s1397, 1
    %1399 = vsyncpa [#allocation4], 1
    %s1400 = scalar_lea.sflag [#allocation4], 1
    %1401 = vsyncpa %s1400, 1

</llo_original>
